<compile_context>
chip_gen: v7x
topology: tpu7x:2x2x1
jax: 0.10.0
libtpu: 0.0.40
codegen_flags: <defaults>
</compile_context>

<pallas_src>
import math

import jax
import jax.numpy as jnp
from jax import lax
from jax.experimental import pallas as pl
from jax.experimental.pallas import tpu as pltpu

# ---- module constants (from the PyTorch source) ----
D_MODEL = 768
D_FF = 768 * 4

_INV_SQRT2 = 1.0 / math.sqrt(2.0)


def _gelu_exact(x):
    # 0.5*x*(1 + erf(x/sqrt(2))) with erf via Abramowitz & Stegun 7.1.26
    # (max abs err ~1.5e-7), built only from exp/abs/where/mul/add which are
    # guaranteed to lower in Mosaic (lax.erf lowering is not guaranteed).
    z = x * _INV_SQRT2
    az = jnp.abs(z)
    t = 1.0 / (1.0 + 0.3275911 * az)
    poly = t * (0.254829592
                + t * (-0.284496736
                       + t * (1.421413741
                              + t * (-1.453152027 + t * 1.061405429))))
    erf_abs = 1.0 - poly * jnp.exp(-az * az)
    erf_z = jnp.where(z >= 0.0, erf_abs, -erf_abs)
    return 0.5 * x * (1.0 + erf_z)


def ffn_kernel(x_ref, w1_ref, b1_ref, w2_ref, b2_ref, o_ref, acc_ref):
    j = pl.program_id(1)

    @pl.when(j == 0)
    def _():
        acc_ref[...] = jnp.zeros_like(acc_ref)

    # (TM, D) @ (D, TF) -> (TM, TF), bias + exact gelu, then immediately
    # contract against the matching (TF, D) slice of W2 into the accumulator.
    h = jnp.dot(x_ref[...], w1_ref[...], preferred_element_type=jnp.float32)
    h = _gelu_exact(h + b1_ref[...])
    acc_ref[...] += jnp.dot(h, w2_ref[...], preferred_element_type=jnp.float32)

    @pl.when(j == pl.num_programs(1) - 1)
    def _():
        o_ref[...] = (acc_ref[...] + b2_ref[...]).astype(o_ref.dtype)


def _round_up(n, m):
    return ((n + m - 1) // m) * m


def poswise_ffn(x, w1, b1, w2, b2, *, tm=256, tf=512):
    """x: (..., D). w1: (D, F) (= fc1.weight.T), b1: (F,), w2: (F, D), b2: (D,)."""
    orig_shape = x.shape
    D = orig_shape[-1]
    F = w1.shape[1]
    assert F % tf == 0, "d_ff tile must divide d_ff"

    xf = x.reshape(-1, D)
    N = xf.shape[0]
    tm = min(tm, _round_up(N, 8))          # small inputs: single sublane-aligned tile
    n_pad = _round_up(N, tm)
    if n_pad != N:
        xf = jnp.pad(xf, ((0, n_pad - N), (0, 0)))

    grid = (n_pad // tm, F // tf)

    out = pl.pallas_call(
        ffn_kernel,
        out_shape=jax.ShapeDtypeStruct((n_pad, D), x.dtype),
        grid_spec=pltpu.PrefetchScalarGridSpec(
            num_scalar_prefetch=0,
            grid=grid,
            in_specs=[
                pl.BlockSpec((tm, D), lambda i, j: (i, 0)),   # x rows
                pl.BlockSpec((D, tf), lambda i, j: (0, j)),   # W1 column tile
                pl.BlockSpec((1, tf), lambda i, j: (0, j)),   # b1 tile
                pl.BlockSpec((tf, D), lambda i, j: (j, 0)),   # W2 row tile
                pl.BlockSpec((1, D), lambda i, j: (0, 0)),    # b2 (full)
            ],
            out_specs=pl.BlockSpec((tm, D), lambda i, j: (i, 0)),
            scratch_shapes=[pltpu.VMEM((tm, D), jnp.float32)],
        ),
        compiler_params=pltpu.CompilerParams(
            dimension_semantics=("parallel", "arbitrary"),
        ),
    )(xf, w1, b1.reshape(1, F), w2, b2.reshape(1, D))

    return out[:N].reshape(orig_shape)


def reference(x, w1, b1, w2, b2):
    h = jnp.einsum("bsd,df->bsf", x, w1, precision=lax.Precision.HIGHEST) + b1
    h = 0.5 * h * (1.0 + lax.erf(h * _INV_SQRT2))
    return jnp.einsum("bsf,fd->bsd", h, w2, precision=lax.Precision.HIGHEST) + b2


if __name__ == "__main__":
    key = jax.random.PRNGKey(0)
    k_x, k_w1, k_b1, k_w2, k_b2 = jax.random.split(key, 5)

    # small example: batch=2, seq=8, d_model/d_ff fixed by the module
    B, S = 2, 8
    x = jax.random.normal(k_x, (B, S, D_MODEL), jnp.float32)

    # parameters (w1/w2 stored as (in, out), i.e. PyTorch weight.T)
    w1 = jax.random.normal(k_w1, (D_MODEL, D_FF), jnp.float32) / math.sqrt(D_MODEL)
    b1 = jax.random.normal(k_b1, (D_FF,), jnp.float32) * 0.02
    w2 = jax.random.normal(k_w2, (D_FF, D_MODEL), jnp.float32) / math.sqrt(D_FF)
    b2 = jax.random.normal(k_b2, (D_MODEL,), jnp.float32) * 0.02

    run = jax.jit(poswise_ffn)
    out = jax.block_until_ready(run(x, w1, b1, w2, b2))

    ref = reference(x, w1, b1, w2, b2)
    assert out.shape == (B, S, D_MODEL)
    assert jnp.allclose(out, ref, atol=5e-3, rtol=5e-3), float(jnp.max(jnp.abs(out - ref)))

    print("KERNEL_OK")
</pallas_src>

<mosaic_0001>
module attributes {stable_mosaic.version = 11 : i64} {
  func.func @ffn_kernel(%arg0: i32, %arg1: i32, %arg2: memref<16x768xf32, #tpu.memory_space<vmem>>, %arg3: memref<768x512xf32, #tpu.memory_space<vmem>>, %arg4: memref<1x512xf32, #tpu.memory_space<vmem>>, %arg5: memref<512x768xf32, #tpu.memory_space<vmem>>, %arg6: memref<1x768xf32, #tpu.memory_space<vmem>>, %arg7: memref<16x768xf32, #tpu.memory_space<vmem>>, %arg8: memref<16x768xf32, #tpu.memory_space<vmem>>) attributes {dimension_semantics = [#tpu.dimension_semantics<parallel>, #tpu.dimension_semantics<arbitrary>], iteration_bounds = array<i64: 1, 6>, scalar_prefetch = 0 : i64, scratch_operands = 1 : i64, tpu.core_type = #tpu.core_type<tc>, window_params = [{transform_indices = @transform_0, window_bounds = array<i64: 16, 768>}, {transform_indices = @transform_1, window_bounds = array<i64: 768, 512>}, {transform_indices = @transform_2, window_bounds = array<i64: 1, 512>}, {transform_indices = @transform_3, window_bounds = array<i64: 512, 768>}, {pipeline_mode = #tpu.pipeline_mode<synchronous>, transform_indices = @transform_4, window_bounds = array<i64: 1, 768>}, {transform_indices = @transform_5, window_bounds = array<i64: 16, 768>}]} {
    %c0_i32 = arith.constant 0 : i32
    %0 = arith.cmpi eq, %arg1, %c0_i32 : i32
    %1 = arith.extui %0 : i1 to i32
    %c0_i32_0 = arith.constant 0 : i32
    %2 = arith.cmpi ne, %1, %c0_i32_0 : i32
    scf.if %2 {
      %cst_29 = arith.constant 0.000000e+00 : f32
      %57 = vector.broadcast %cst_29 : f32 to vector<16x768xf32>
      %c0_30 = arith.constant 0 : index
      %c0_31 = arith.constant 0 : index
      %58 = vector.load %arg8[%c0_30, %c0_31] : memref<16x768xf32, #tpu.memory_space<vmem>>, vector<16x768xf32>
      tpu.vector_store %arg8[%c0_30, %c0_31], %57 {strides = array<i32>} : memref<16x768xf32, #tpu.memory_space<vmem>>, vector<16x768xf32>,
    } else {
    }
    %c0 = arith.constant 0 : index
    %c0_1 = arith.constant 0 : index
    %3 = vector.load %arg2[%c0, %c0_1] : memref<16x768xf32, #tpu.memory_space<vmem>>, vector<16x768xf32>
    %c0_2 = arith.constant 0 : index
    %c0_3 = arith.constant 0 : index
    %4 = vector.load %arg3[%c0_2, %c0_3] : memref<768x512xf32, #tpu.memory_space<vmem>>, vector<768x512xf32>
    %cst = arith.constant dense<0.000000e+00> : vector<16x512xf32>
    %5 = tpu.matmul %3, %4, %cst {dimension_numbers = #tpu.dot_dimension_numbers<[1], [0], [0], [1], [0, 0, 1, 1], [], []>} : vector<16x768xf32>, vector<768x512xf32>, vector<16x512xf32> -> vector<16x512xf32>
    %c0_4 = arith.constant 0 : index
    %c0_5 = arith.constant 0 : index
    %6 = vector.load %arg4[%c0_4, %c0_5] : memref<1x512xf32, #tpu.memory_space<vmem>>, vector<1x512xf32>
    %7 = vector.broadcast %6 : vector<1x512xf32> to vector<16x512xf32>
    %8 = arith.addf %5, %7 : vector<16x512xf32>
    %cst_6 = arith.constant 0.707106769 : f32
    %9 = vector.broadcast %cst_6 : f32 to vector<16x512xf32>
    %10 = arith.mulf %8, %9 : vector<16x512xf32>
    %11 = math.absf %10 : vector<16x512xf32>
    %cst_7 = arith.constant 0.327591091 : f32
    %12 = vector.broadcast %cst_7 : f32 to vector<16x512xf32>
    %13 = arith.mulf %12, %11 : vector<16x512xf32>
    %cst_8 = arith.constant 1.000000e+00 : f32
    %14 = vector.broadcast %cst_8 : f32 to vector<16x512xf32>
    %15 = arith.addf %14, %13 : vector<16x512xf32>
    %cst_9 = arith.constant 1.000000e+00 : f32
    %16 = vector.broadcast %cst_9 : f32 to vector<16x512xf32>
    %17 = arith.divf %16, %15 : vector<16x512xf32>
    %cst_10 = arith.constant 1.06140542 : f32
    %18 = vector.broadcast %cst_10 : f32 to vector<16x512xf32>
    %19 = arith.mulf %17, %18 : vector<16x512xf32>
    %cst_11 = arith.constant -1.45315206 : f32
    %20 = vector.broadcast %cst_11 : f32 to vector<16x512xf32>
    %21 = arith.addf %20, %19 : vector<16x512xf32>
    %22 = arith.mulf %17, %21 : vector<16x512xf32>
    %cst_12 = arith.constant 1.42141378 : f32
    %23 = vector.broadcast %cst_12 : f32 to vector<16x512xf32>
    %24 = arith.addf %23, %22 : vector<16x512xf32>
    %25 = arith.mulf %17, %24 : vector<16x512xf32>
    %cst_13 = arith.constant -0.284496725 : f32
    %26 = vector.broadcast %cst_13 : f32 to vector<16x512xf32>
    %27 = arith.addf %26, %25 : vector<16x512xf32>
    %28 = arith.mulf %17, %27 : vector<16x512xf32>
    %cst_14 = arith.constant 0.254829586 : f32
    %29 = vector.broadcast %cst_14 : f32 to vector<16x512xf32>
    %30 = arith.addf %29, %28 : vector<16x512xf32>
    %31 = arith.mulf %17, %30 : vector<16x512xf32>
    %cst_15 = arith.constant 0.000000e+00 : f32
    %32 = vector.broadcast %cst_15 : f32 to vector<16x512xf32>
    %33 = arith.subf %32, %11 : vector<16x512xf32>
    %34 = arith.mulf %33, %11 : vector<16x512xf32>
    %35 = math.exp %34 : vector<16x512xf32>
    %36 = arith.mulf %31, %35 : vector<16x512xf32>
    %cst_16 = arith.constant 1.000000e+00 : f32
    %37 = vector.broadcast %cst_16 : f32 to vector<16x512xf32>
    %38 = arith.subf %37, %36 : vector<16x512xf32>
    %cst_17 = arith.constant 0.000000e+00 : f32
    %39 = vector.broadcast %cst_17 : f32 to vector<16x512xf32>
    %40 = arith.cmpf oge, %10, %39 : vector<16x512xf32>
    %cst_18 = arith.constant 0.000000e+00 : f32
    %41 = vector.broadcast %cst_18 : f32 to vector<16x512xf32>
    %42 = arith.subf %41, %38 : vector<16x512xf32>
    %43 = arith.select %40, %38, %42 : vector<16x512xi1>, vector<16x512xf32>
    %cst_19 = arith.constant 5.000000e-01 : f32
    %44 = vector.broadcast %cst_19 : f32 to vector<16x512xf32>
    %45 = arith.mulf %44, %8 : vector<16x512xf32>
    %cst_20 = arith.constant 1.000000e+00 : f32
    %46 = vector.broadcast %cst_20 : f32 to vector<16x512xf32>
    %47 = arith.addf %46, %43 : vector<16x512xf32>
    %48 = arith.mulf %45, %47 : vector<16x512xf32>
    %c0_21 = arith.constant 0 : index
    %c0_22 = arith.constant 0 : index
    %49 = vector.load %arg8[%c0_21, %c0_22] : memref<16x768xf32, #tpu.memory_space<vmem>>, vector<16x768xf32>
    %c0_23 = arith.constant 0 : index
    %c0_24 = arith.constant 0 : index
    %50 = vector.load %arg5[%c0_23, %c0_24] : memref<512x768xf32, #tpu.memory_space<vmem>>, vector<512x768xf32>
    %cst_25 = arith.constant dense<0.000000e+00> : vector<16x768xf32>
    %51 = tpu.matmul %48, %50, %cst_25 {dimension_numbers = #tpu.dot_dimension_numbers<[1], [0], [0], [1], [0, 0, 1, 1], [], []>} : vector<16x512xf32>, vector<512x768xf32>, vector<16x768xf32> -> vector<16x768xf32>
    %52 = arith.addf %49, %51 : vector<16x768xf32>
    %c0_26 = arith.constant 0 : index
    %c0_27 = arith.constant 0 : index
    %53 = vector.load %arg8[%c0_26, %c0_27] : memref<16x768xf32, #tpu.memory_space<vmem>>, vector<16x768xf32>
    tpu.vector_store %arg8[%c0_26, %c0_27], %52 {strides = array<i32>} : memref<16x768xf32, #tpu.memory_space<vmem>>, vector<16x768xf32>,
    %c5_i32 = arith.constant 5 : i32
    %54 = arith.cmpi eq, %arg1, %c5_i32 : i32
    %55 = arith.extui %54 : i1 to i32
    %c0_i32_28 = arith.constant 0 : i32
    %56 = arith.cmpi ne, %55, %c0_i32_28 : i32
    scf.if %56 {
      %c0_29 = arith.constant 0 : index
      %c0_30 = arith.constant 0 : index
      %57 = vector.load %arg8[%c0_29, %c0_30] : memref<16x768xf32, #tpu.memory_space<vmem>>, vector<16x768xf32>
      %c0_31 = arith.constant 0 : index
      %c0_32 = arith.constant 0 : index
      %58 = vector.load %arg6[%c0_31, %c0_32] : memref<1x768xf32, #tpu.memory_space<vmem>>, vector<1x768xf32>
      %59 = vector.broadcast %58 : vector<1x768xf32> to vector<16x768xf32>
      %60 = arith.addf %57, %59 : vector<16x768xf32>
      %c0_33 = arith.constant 0 : index
      %c0_34 = arith.constant 0 : index
      %61 = vector.load %arg7[%c0_33, %c0_34] : memref<16x768xf32, #tpu.memory_space<vmem>>, vector<16x768xf32>
      tpu.vector_store %arg7[%c0_33, %c0_34], %60 {strides = array<i32>} : memref<16x768xf32, #tpu.memory_space<vmem>>, vector<16x768xf32>,
    } else {
    }
    return
  }
  func.func @transform_0(%arg0: i32, %arg1: i32) -> (i32, i32) {
    %c0_i32 = arith.constant 0 : i32
    %c0_i32_0 = arith.constant 0 : i32
    return %arg0, %c0_i32 : i32, i32
  }
  func.func @transform_1(%arg0: i32, %arg1: i32) -> (i32, i32) {
    %c0_i32 = arith.constant 0 : i32
    %c0_i32_0 = arith.constant 0 : i32
    return %c0_i32, %arg1 : i32, i32
  }
  func.func @transform_2(%arg0: i32, %arg1: i32) -> (i32, i32) {
    %c0_i32 = arith.constant 0 : i32
    %c0_i32_0 = arith.constant 0 : i32
    return %c0_i32, %arg1 : i32, i32
  }
  func.func @transform_3(%arg0: i32, %arg1: i32) -> (i32, i32) {
    %c0_i32 = arith.constant 0 : i32
    %c0_i32_0 = arith.constant 0 : i32
    return %arg1, %c0_i32 : i32, i32
  }
  func.func @transform_4(%arg0: i32, %arg1: i32) -> (i32, i32) {
    %c0_i32 = arith.constant 0 : i32
    %c0_i32_0 = arith.constant 0 : i32
    %c0_i32_1 = arith.constant 0 : i32
    return %c0_i32, %c0_i32_0 : i32, i32
  }
  func.func @transform_5(%arg0: i32, %arg1: i32) -> (i32, i32) {
    %c0_i32 = arith.constant 0 : i32
    %c0_i32_0 = arith.constant 0 : i32
    return %arg0, %c0_i32 : i32, i32
  }
}

</mosaic_0001>

<llo_original>
// kernel: poswise_ffn.1
$region0: #{poswise_ffn.1}
  #allocation0 [shape = 'u32[]', space=smem, size = 0x4, offset = 0x4, fixed_abs, tag = 'smem constant byte address 0x4 - core index']
  #allocation1 [shape = 'u32[144,128]{1,0:T(1,128)}', space=vmem, size = 0x12000, scoped, tag = 'internal scratch']
  #allocation2 [shape = 'f32[16,768]{1,0:T(8,128)}', space=vmem, size = 0xc000, scoped, tag = 'scratch operand']
  %s0 = inlined_call_operand.hbm [shape: f32[16,768], index: 0, kind: input, shape index: {}]
  %s1 = inlined_call_operand.hbm [shape: f32[768,3072], index: 1, kind: input, shape index: {}]
  %s2 = inlined_call_operand.hbm [shape: f32[1,3072], index: 2, kind: input, shape index: {}]
  %s3 = inlined_call_operand.hbm [shape: f32[3072,768], index: 3, kind: input, shape index: {}]
  %s4 = inlined_call_operand.vmem [shape: f32[1,768], index: 4, kind: input, shape index: {}]
  %s5 = inlined_call_operand.hbm [shape: f32[16,768], index: 5, kind: output, shape index: {}]
  %s6 = sld [smem:[#allocation0]]
  $region77: #{poswise_ffn.1} parent=0
    _
  %s8 = ssub.s32 1, %s6
  %s9 = scalar_select 0, %s8, %s6
  $region1: #{poswise_ffn.1} parent=0
    #allocation3 [shape = 'u8[49152]{0}', space=vmem, size = 0xc000, scoped, tag = 'input window, operand 0, single buffered']
    #allocation4 [shape = 's32[2]{0}', space=sflag, size = 0x8, scoped, tag = 'scoped memory for poswise_ffn.1']
    #allocation5 [shape = 's32[2]{0}', space=sflag, size = 0x8, scoped, tag = 'scoped memory for poswise_ffn.1']
    #allocation6 [shape = 'u8[3145728]{0}', space=vmem, size = 0x300000, scoped, tag = 'input window, operand 1']
    #allocation7 [shape = 's32[2]{0}', space=sflag, size = 0x8, scoped, tag = 'scoped memory for poswise_ffn.1']
    #allocation8 [shape = 'u8[4096]{0}', space=vmem, size = 0x1000, scoped, tag = 'input window, operand 2']
    #allocation9 [shape = 'u8[3145728]{0}', space=vmem, size = 0x300000, scoped, tag = 'input window, operand 3']
    #allocation10 [shape = 's32[2]{0}', space=sflag, size = 0x8, scoped, tag = 'scoped memory for poswise_ffn.1']
    #allocation11 [shape = 'u8[49152]{0}', space=vmem, size = 0xc000, scoped, tag = 'output window, operand 0, single buffered']
    %10 = vsyncpa [#allocation4], 0
    %11 = vsyncpa [#allocation7], 0
    %s12 = scalar_lea.sflag [#allocation7], 1
    %13 = vsyncpa %s12, 0
    %14 = vsyncpa [#allocation10], 0
    %s15 = scalar_lea.sflag [#allocation10], 1
    %16 = vsyncpa %s15, 0
    %17 = vsyncpa [#allocation5], 0
    loop: start=0, step=1, limit=8
    $region2: #{poswise_ffn.1} parent=1 // loop_pre_header
      _
    $region3: #{poswise_ffn.1} parent=1 // loop_header
      %s19 = sphi 0, %s23
      %p20 = scmp.ge.s32.totalorder %s19, 8
      %s26 = sphi 0, %s38
      %s27 = sphi 0, %s34
      %s28 = sphi 0, %s26
      %s29 = sphi 0, %s27
      %s30 = sphi 0, %s28
      %s31 = sphi 0, %s29
      %s41 = sphi 0, %s43
      %s44 = sphi 0, %s41
      %s45 = sphi 0, %s44
      %s61 = sphi 0, %s45
      %s67 = sphi 0, %s69
      %s70 = sphi 0, %s67
      %s71 = sphi 0, %s70
      %s87 = sphi 0, %s71
      %s93 = sphi 0, %s95
      %s96 = sphi 0, %s93
      %s97 = sphi 0, %s96
      %s113 = sphi 0, %s97
      %s119 = sphi 0, %s121
      %s122 = sphi 0, %s119
      %s123 = sphi 0, %s122
      %s139 = sphi 0, %s123
      %s143 = sphi 0, %s143
      %s145 = sphi 0, %s143
      %s146 = sphi 0, %s145
      %s160 = sphi 0, %s146
      %s166 = sphi 0, %s168
      %s169 = sphi 0, %s166
      %s170 = sphi 0, %s169
      %s186 = sphi 0, %s170
    $region4: #{poswise_ffn.1} parent=1 // loop_header_branch
      %22 = sbr.rel (%p20) target = $region8
    $region5: #{poswise_ffn.1} parent=1 // loop_body
      %s24 = ssub.s32 %s19, 1
      %s25 = ssub.s32 %s19, 2
      %s32 = sadd.s32 1, %s27
      %p33 = scmp.ge.s32.totalorder %s32, 6
      %s34 = scalar_select %p33, 0, %s32
      %s35 = sadd.s32 1, %s26
      %s36 = scalar_select %p33, %s35, %s26
      %p37 = scmp.ge.s32.totalorder %s36, 1
      %s38 = scalar_select %p37, 0, %s36
      %s39 = ssub.s32 %s26, %s38
      %p40 = scmp.eq.s32.totalorder %s39, 0
      %s42 = sadd.s32 %s41, 1
      %s43 = scalar_select %p40, %s41, %s42
      %p46 = pneg %p40
      %p47 = scmp.eq.s32.totalorder %s19, 5
      %p48 = por %p46, %p47
      %p49 = scmp.ne.s32.totalorder %s41, %s44
      %p50 = scmp.eq.s32.totalorder %s19, 0
      %p51 = por %p49, %p50
      %p52 = scmp.ne.s32.totalorder %s41, %s44
      %p53 = scmp.eq.s32.totalorder %s24, 5
      %p54 = por %p52, %p53
      %p55 = scmp.ne.s32.totalorder %s44, %s45
      %p56 = scmp.eq.s32.totalorder %s24, 0
      %p57 = por %p55, %p56
      %p58 = scmp.ne.s32.totalorder %s44, %s45
      %p59 = scmp.eq.s32.totalorder %s25, 5
      %p60 = por %p58, %p59
      %p62 = scmp.ne.s32.totalorder %s45, %s61
      %p63 = scmp.eq.s32.totalorder %s25, 0
      %p64 = por %p62, %p63
      %s65 = ssub.s32 %s27, %s34
      %p66 = scmp.eq.s32.totalorder %s65, 0
      %s68 = sadd.s32 %s67, 1
      %s69 = scalar_select %p66, %s67, %s68
      %p72 = pneg %p66
      %p73 = scmp.eq.s32.totalorder %s19, 5
      %p74 = por %p72, %p73
      %p75 = scmp.ne.s32.totalorder %s67, %s70
      %p76 = scmp.eq.s32.totalorder %s19, 0
      %p77 = por %p75, %p76
      %p78 = scmp.ne.s32.totalorder %s67, %s70
      %p79 = scmp.eq.s32.totalorder %s24, 5
      %p80 = por %p78, %p79
      %p81 = scmp.ne.s32.totalorder %s70, %s71
      %p82 = scmp.eq.s32.totalorder %s24, 0
      %p83 = por %p81, %p82
      %p84 = scmp.ne.s32.totalorder %s70, %s71
      %p85 = scmp.eq.s32.totalorder %s25, 5
      %p86 = por %p84, %p85
      %p88 = scmp.ne.s32.totalorder %s71, %s87
      %p89 = scmp.eq.s32.totalorder %s25, 0
      %p90 = por %p88, %p89
      %s91 = ssub.s32 %s27, %s34
      %p92 = scmp.eq.s32.totalorder %s91, 0
      %s94 = sadd.s32 %s93, 1
      %s95 = scalar_select %p92, %s93, %s94
      %p98 = pneg %p92
      %p99 = scmp.eq.s32.totalorder %s19, 5
      %p100 = por %p98, %p99
      %p101 = scmp.ne.s32.totalorder %s93, %s96
      %p102 = scmp.eq.s32.totalorder %s19, 0
      %p103 = por %p101, %p102
      %p104 = scmp.ne.s32.totalorder %s93, %s96
      %p105 = scmp.eq.s32.totalorder %s24, 5
      %p106 = por %p104, %p105
      %p107 = scmp.ne.s32.totalorder %s96, %s97
      %p108 = scmp.eq.s32.totalorder %s24, 0
      %p109 = por %p107, %p108
      %p110 = scmp.ne.s32.totalorder %s96, %s97
      %p111 = scmp.eq.s32.totalorder %s25, 5
      %p112 = por %p110, %p111
      %p114 = scmp.ne.s32.totalorder %s97, %s113
      %p115 = scmp.eq.s32.totalorder %s25, 0
      %p116 = por %p114, %p115
      %s117 = ssub.s32 %s27, %s34
      %p118 = scmp.eq.s32.totalorder %s117, 0
      %s120 = sadd.s32 %s119, 1
      %s121 = scalar_select %p118, %s119, %s120
      %p124 = pneg %p118
      %p125 = scmp.eq.s32.totalorder %s19, 5
      %p126 = por %p124, %p125
      %p127 = scmp.ne.s32.totalorder %s119, %s122
      %p128 = scmp.eq.s32.totalorder %s19, 0
      %p129 = por %p127, %p128
      %p130 = scmp.ne.s32.totalorder %s119, %s122
      %p131 = scmp.eq.s32.totalorder %s24, 5
      %p132 = por %p130, %p131
      %p133 = scmp.ne.s32.totalorder %s122, %s123
      %p134 = scmp.eq.s32.totalorder %s24, 0
      %p135 = por %p133, %p134
      %p136 = scmp.ne.s32.totalorder %s122, %s123
      %p137 = scmp.eq.s32.totalorder %s25, 5
      %p138 = por %p136, %p137
      %p140 = scmp.ne.s32.totalorder %s123, %s139
      %p141 = scmp.eq.s32.totalorder %s25, 0
      %p142 = por %p140, %p141
      %s144 = sadd.s32 %s143, 1
      %p147 = scmp.eq.s32.totalorder %s19, 5
      %p148 = scmp.ne.s32.totalorder %s143, %s145
      %p149 = scmp.eq.s32.totalorder %s19, 0
      %p150 = por %p148, %p149
      %p151 = scmp.ne.s32.totalorder %s143, %s145
      %p152 = scmp.eq.s32.totalorder %s24, 5
      %p153 = por %p151, %p152
      %p154 = scmp.ne.s32.totalorder %s145, %s146
      %p155 = scmp.eq.s32.totalorder %s24, 0
      %p156 = por %p154, %p155
      %p157 = scmp.ne.s32.totalorder %s145, %s146
      %p158 = scmp.eq.s32.totalorder %s25, 5
      %p159 = por %p157, %p158
      %p161 = scmp.ne.s32.totalorder %s146, %s160
      %p162 = scmp.eq.s32.totalorder %s25, 0
      %p163 = por %p161, %p162
      %s164 = ssub.s32 %s26, %s38
      %p165 = scmp.eq.s32.totalorder %s164, 0
      %s167 = sadd.s32 %s166, 1
      %s168 = scalar_select %p165, %s166, %s167
      %p171 = pneg %p165
      %p172 = scmp.eq.s32.totalorder %s19, 5
      %p173 = por %p171, %p172
      %p174 = scmp.ne.s32.totalorder %s166, %s169
      %p175 = scmp.eq.s32.totalorder %s19, 0
      %p176 = por %p174, %p175
      %p177 = scmp.ne.s32.totalorder %s166, %s169
      %p178 = scmp.eq.s32.totalorder %s24, 5
      %p179 = por %p177, %p178
      %p180 = scmp.ne.s32.totalorder %s169, %s170
      %p181 = scmp.eq.s32.totalorder %s24, 0
      %p182 = por %p180, %p181
      %p183 = scmp.ne.s32.totalorder %s169, %s170
      %p184 = scmp.eq.s32.totalorder %s25, 5
      %p185 = por %p183, %p184
      %p187 = scmp.ne.s32.totalorder %s170, %s186
      %p188 = scmp.eq.s32.totalorder %s25, 0
      %p189 = por %p187, %p188
      %p190 = scmp.le.s32.totalorder 1, %s19
      %p191 = scmp.lt.s32.totalorder %s19, 7
      %p192 = pnand %p190, %p191
      %p193 = pneg %p192
      // Predicated region
      $region9: #{poswise_ffn.1} parent=5 // pred_check
        _
      $region10: #{poswise_ffn.1} parent=5 // pred_check_branch
        %195 = sbr.rel (%p192) target = $region12
      $region11: #{poswise_ffn.1} parent=5 // pred_region
        %s196 = ssub.s32 %s19, 1
        // Predicated region
        $region13: #{poswise_ffn.1} parent=11 // pred_check
          %p197 = pneg %p57
        $region14: #{poswise_ffn.1} parent=11 // pred_check_branch
          %199 = sbr.rel (%p197) target = $region16
        $region15: #{poswise_ffn.1} parent=11 // pred_region
          %s200 = smul.u32 2, %s28
          %s202 = ssub.s32 1536, 1536
          %203 = vsyncadd [#allocation4], %s202
          %s204 = smul.addr %s200, 6
          %s205 = smul.addr %s204, 128
          %s206 = scalar_lea.hbm %s0, %s205
          %s207 = sshll.u32 [#allocation3], 4
          %s208 = int_to_ptr.vmem [resolvable:$true] %s207
          %213 = dma.hbm_to_vmem [thread:$0]  %s206, 1536, %s208, [#allocation4], 768, 768, 48
        $region16: #{poswise_ffn.1} parent=11 // pred_fallthru
          _
        // Predicated region
        $region17: #{poswise_ffn.1} parent=11 // pred_check
          %p214 = pneg %p156
        $region18: #{poswise_ffn.1} parent=11 // pred_check_branch
          %216 = sbr.rel (%p214) target = $region20
        $region19: #{poswise_ffn.1} parent=11 // pred_region
          _
        $region20: #{poswise_ffn.1} parent=11 // pred_fallthru
          _
      $region12: #{poswise_ffn.1} parent=5 // pred_fallthru
        _
      %p217 = scmp.lt.s32.totalorder %s19, 6
      // Predicated region
      $region21: #{poswise_ffn.1} parent=5 // pred_check
        %p218 = pneg %p217
      $region22: #{poswise_ffn.1} parent=5 // pred_check_branch
        %220 = sbr.rel (%p218) target = $region24
      $region23: #{poswise_ffn.1} parent=5 // pred_region
        // Predicated region
        $region25: #{poswise_ffn.1} parent=23 // pred_check
          %p221 = pneg %p77
        $region26: #{poswise_ffn.1} parent=23 // pred_check_branch
          %223 = sbr.rel (%p221) target = $region28
        $region27: #{poswise_ffn.1} parent=23 // pred_region
          %s224 = sand.u32 %s19, 1
          %s225 = scalar_lea.sflag [#allocation7], %s224
          %s226 = sand.u32 %s67, 1
          %s227 = smul.addr %s226, 3072
          %s228 = scalar_lea.vmem [#allocation6], %s227
          %s229 = smul.u32 4, %s27
          %s231 = ssub.s32 49152, 49152
          %232 = vsyncadd %s225, %s231
          %s233 = smul.addr %s229, 128
          %s234 = scalar_lea.hbm %s1, %s233
          %s235 = sshll.u32 %s228, 4
          %s236 = int_to_ptr.vmem [resolvable:$true] %s235
          %241 = dma.hbm_to_vmem [thread:$0]  %s234, 49152, %s236, %s225, 3072, 512, 32
        $region28: #{poswise_ffn.1} parent=23 // pred_fallthru
          _
        // Predicated region
        $region29: #{poswise_ffn.1} parent=23 // pred_check
          %p242 = pneg %p103
        $region30: #{poswise_ffn.1} parent=23 // pred_check_branch
          %244 = sbr.rel (%p242) target = $region32
        $region31: #{poswise_ffn.1} parent=23 // pred_region
          %s245 = sand.u32 %s19, 1
          %s246 = scalar_lea.sflag [#allocation7], %s245
          %s247 = sand.u32 %s93, 1
          %s248 = smul.addr %s247, 4
          %s249 = scalar_lea.vmem [#allocation8], %s248
          %s250 = smul.u32 4, %s27
          %s252 = ssub.s32 64, 64
          %253 = vsyncadd %s246, %s252
          %s254 = smul.addr %s250, 16
          %s255 = scalar_lea.hbm %s2, %s254
          %s257 = sshll.u32 %s249, 4
          %s258 = int_to_ptr.vmem [resolvable:$true] %s257
          %260 = dma.hbm_to_vmem [thread:$0]  %s255, 64, %s258, %s246
        $region32: #{poswise_ffn.1} parent=23 // pred_fallthru
          _
        // Predicated region
        $region33: #{poswise_ffn.1} parent=23 // pred_check
          %p261 = pneg %p129
        $region34: #{poswise_ffn.1} parent=23 // pred_check_branch
          %263 = sbr.rel (%p261) target = $region36
        $region35: #{poswise_ffn.1} parent=23 // pred_region
          %s264 = sand.u32 %s119, 1
          %s265 = scalar_lea.sflag [#allocation10], %s264
          %s266 = sand.u32 %s119, 1
          %s267 = smul.addr %s266, 3072
          %s268 = scalar_lea.vmem [#allocation9], %s267
          %s269 = smul.u32 64, %s27
          %s271 = ssub.s32 49152, 49152
          %272 = vsyncadd %s265, %s271
          %s273 = smul.addr %s269, 6
          %s274 = smul.addr %s273, 128
          %s275 = scalar_lea.hbm %s3, %s274
          %s276 = sshll.u32 %s268, 4
          %s277 = int_to_ptr.vmem [resolvable:$true] %s276
          %282 = dma.hbm_to_vmem [thread:$0]  %s275, 49152, %s277, %s265, 768, 768, 48
        $region36: #{poswise_ffn.1} parent=23 // pred_fallthru
          _
      $region24: #{poswise_ffn.1} parent=5 // pred_fallthru
        _
      %p283 = scmp.le.s32.totalorder 1, %s19
      %p284 = scmp.lt.s32.totalorder %s19, 7
      %p285 = pnand %p283, %p284
      %p286 = pneg %p285
      // Predicated region
      $region37: #{poswise_ffn.1} parent=5 // pred_check
        _
      $region38: #{poswise_ffn.1} parent=5 // pred_check_branch
        %288 = sbr.rel (%p285) target = $region40
      $region39: #{poswise_ffn.1} parent=5 // pred_region
        %s289 = ssub.s32 %s19, 1
        // Predicated region
        $region41: #{poswise_ffn.1} parent=39 // pred_check
          %p290 = pneg %p57
        $region42: #{poswise_ffn.1} parent=39 // pred_check_branch
          %292 = sbr.rel (%p290) target = $region44
        $region43: #{poswise_ffn.1} parent=39 // pred_region
          %293 = dma.done [#allocation4], 1536
        $region44: #{poswise_ffn.1} parent=39 // pred_fallthru
          _
        %s294 = sand.u32 %s24, 1
        %s295 = scalar_lea.sflag [#allocation7], %s294
        %s296 = sand.u32 %s70, 1
        %s297 = smul.addr %s296, 3072
        %s298 = scalar_lea.vmem [#allocation6], %s297
        // Predicated region
        $region45: #{poswise_ffn.1} parent=39 // pred_check
          %p299 = pneg %p83
        $region46: #{poswise_ffn.1} parent=39 // pred_check_branch
          %301 = sbr.rel (%p299) target = $region48
        $region47: #{poswise_ffn.1} parent=39 // pred_region
          %302 = dma.done %s295, 49152
        $region48: #{poswise_ffn.1} parent=39 // pred_fallthru
          _
        %s303 = sand.u32 %s24, 1
        %s304 = scalar_lea.sflag [#allocation7], %s303
        %s305 = sand.u32 %s96, 1
        %s306 = smul.addr %s305, 4
        %s307 = scalar_lea.vmem [#allocation8], %s306
        // Predicated region
        $region49: #{poswise_ffn.1} parent=39 // pred_check
          %p308 = pneg %p109
        $region50: #{poswise_ffn.1} parent=39 // pred_check_branch
          %310 = sbr.rel (%p308) target = $region52
        $region51: #{poswise_ffn.1} parent=39 // pred_region
          %311 = dma.done %s304, 64
        $region52: #{poswise_ffn.1} parent=39 // pred_fallthru
          _
        %s312 = sand.u32 %s122, 1
        %s313 = scalar_lea.sflag [#allocation10], %s312
        %s314 = sand.u32 %s122, 1
        %s315 = smul.addr %s314, 3072
        %s316 = scalar_lea.vmem [#allocation9], %s315
        // Predicated region
        $region53: #{poswise_ffn.1} parent=39 // pred_check
          %p317 = pneg %p135
        $region54: #{poswise_ffn.1} parent=39 // pred_check_branch
          %319 = sbr.rel (%p317) target = $region56
        $region55: #{poswise_ffn.1} parent=39 // pred_region
          %320 = dma.done %s313, 49152
        $region56: #{poswise_ffn.1} parent=39 // pred_fallthru
          _
        %p321 = pneg %p57
        %p322 = pneg %p54
        %s323 = sand.u32 %s24, 1
        %s324 = scalar_lea.sflag [#allocation7], %s323
        %s325 = sand.u32 %s70, 1
        %s326 = smul.addr %s325, 3072
        %s327 = scalar_lea.vmem [#allocation6], %s326
        %p328 = pneg %p83
        %p329 = pneg %p80
        %s330 = sand.u32 %s24, 1
        %s331 = scalar_lea.sflag [#allocation7], %s330
        %s332 = sand.u32 %s96, 1
        %s333 = smul.addr %s332, 4
        %s334 = scalar_lea.vmem [#allocation8], %s333
        %p335 = pneg %p109
        %p336 = pneg %p106
        %s337 = sand.u32 %s122, 1
        %s338 = scalar_lea.sflag [#allocation10], %s337
        %s339 = sand.u32 %s122, 1
        %s340 = smul.addr %s339, 3072
        %s341 = scalar_lea.vmem [#allocation9], %s340
        %p342 = pneg %p135
        %p343 = pneg %p132
        %p344 = pneg %p156
        %p345 = pneg %p153
        %p346 = pneg %p182
        %p347 = pneg %p179
        %s348 = smul.u32 2, %s28
        %s349 = smul.u32 4, %s29
        %s350 = smul.u32 4, %s29
        %s351 = smul.u32 64, %s29
        %s352 = smul.u32 2, %s28
        %p353 = scmp.eq.s32.totalorder %s29, 0
        // Predicated region
        $region57: #{poswise_ffn.1} parent=39 // pred_check
          %p354 = pneg %p353
        $region58: #{poswise_ffn.1} parent=39 // pred_check_branch
          %356 = sbr.rel (%p354) target = $region60
        $region59: #{poswise_ffn.1} parent=39 // pred_region
          %357 = vst [vmem:[#allocation2] sm:$0xff] 0.0
          %358 = vst [vmem:[#allocation2 + $0x8] sm:$0xff] 0.0
          %359 = vst [vmem:[#allocation2 + $0x10] sm:$0xff] 0.0
          %360 = vst [vmem:[#allocation2 + $0x18] sm:$0xff] 0.0
          %361 = vst [vmem:[#allocation2 + $0x20] sm:$0xff] 0.0
          %362 = vst [vmem:[#allocation2 + $0x28] sm:$0xff] 0.0
          %363 = vst [vmem:[#allocation2 + $0x30] sm:$0xff] 0.0
          %364 = vst [vmem:[#allocation2 + $0x38] sm:$0xff] 0.0
          %365 = vst [vmem:[#allocation2 + $0x40] sm:$0xff] 0.0
          %366 = vst [vmem:[#allocation2 + $0x48] sm:$0xff] 0.0
          %367 = vst [vmem:[#allocation2 + $0x50] sm:$0xff] 0.0
          %368 = vst [vmem:[#allocation2 + $0x58] sm:$0xff] 0.0
        $region60: #{poswise_ffn.1} parent=39 // pred_fallthru
          _
        %v369 = vld [vmem:[#allocation3] sm:$0xff]
        %v370 = vld [vmem:[#allocation3 + $0x8] sm:$0xff]
        %v371 = vld [vmem:[#allocation3 + $0x10] sm:$0xff]
        %v372 = vld [vmem:[#allocation3 + $0x18] sm:$0xff]
        %v373 = vld [vmem:[#allocation3 + $0x20] sm:$0xff]
        %v374 = vld [vmem:[#allocation3 + $0x28] sm:$0xff]
        %v375 = vld [vmem:[#allocation3 + $0x30] sm:$0xff]
        %v376 = vld [vmem:[#allocation3 + $0x38] sm:$0xff]
        %v377 = vld [vmem:[#allocation3 + $0x40] sm:$0xff]
        %v378 = vld [vmem:[#allocation3 + $0x48] sm:$0xff]
        %v379 = vld [vmem:[#allocation3 + $0x50] sm:$0xff]
        %v380 = vld [vmem:[#allocation3 + $0x58] sm:$0xff]
        %v381 = vld [vmem:[%s298] sm:$0xff]
        %v382 = vld [vmem:[%s298 + $0x8] sm:$0xff]
        %v383 = vld [vmem:[%s298 + $0x10] sm:$0xff]
        %v384 = vld [vmem:[%s298 + $0x18] sm:$0xff]
        %v385 = vld [vmem:[%s298 + $0x20] sm:$0xff]
        %v386 = vld [vmem:[%s298 + $0x28] sm:$0xff]
        %v387 = vld [vmem:[%s298 + $0x30] sm:$0xff]
        %v388 = vld [vmem:[%s298 + $0x38] sm:$0xff]
        %v389 = vld [vmem:[%s298 + $0x40] sm:$0xff]
        %v390 = vld [vmem:[%s298 + $0x48] sm:$0xff]
        %v391 = vld [vmem:[%s298 + $0x50] sm:$0xff]
        %v392 = vld [vmem:[%s298 + $0x58] sm:$0xff]
        %v393 = vld [vmem:[%s298 + $0x60] sm:$0xff]
        %v394 = vld [vmem:[%s298 + $0x68] sm:$0xff]
        %v395 = vld [vmem:[%s298 + $0x70] sm:$0xff]
        %v396 = vld [vmem:[%s298 + $0x78] sm:$0xff]
        %v397 = vld [vmem:[%s298 + $0x80] sm:$0xff]
        %v398 = vld [vmem:[%s298 + $0x88] sm:$0xff]
        %v399 = vld [vmem:[%s298 + $0x90] sm:$0xff]
        %v400 = vld [vmem:[%s298 + $0x98] sm:$0xff]
        %v401 = vld [vmem:[%s298 + $0xa0] sm:$0xff]
        %v402 = vld [vmem:[%s298 + $0xa8] sm:$0xff]
        %v403 = vld [vmem:[%s298 + $0xb0] sm:$0xff]
        %v404 = vld [vmem:[%s298 + $0xb8] sm:$0xff]
        %v405 = vld [vmem:[%s298 + $0xc0] sm:$0xff]
        %v406 = vld [vmem:[%s298 + $0xc8] sm:$0xff]
        %v407 = vld [vmem:[%s298 + $0xd0] sm:$0xff]
        %v408 = vld [vmem:[%s298 + $0xd8] sm:$0xff]
        %v409 = vld [vmem:[%s298 + $0xe0] sm:$0xff]
        %v410 = vld [vmem:[%s298 + $0xe8] sm:$0xff]
        %v411 = vld [vmem:[%s298 + $0xf0] sm:$0xff]
        %v412 = vld [vmem:[%s298 + $0xf8] sm:$0xff]
        %v413 = vld [vmem:[%s298 + $0x100] sm:$0xff]
        %v414 = vld [vmem:[%s298 + $0x108] sm:$0xff]
        %v415 = vld [vmem:[%s298 + $0x110] sm:$0xff]
        %v416 = vld [vmem:[%s298 + $0x118] sm:$0xff]
        %v417 = vld [vmem:[%s298 + $0x120] sm:$0xff]
        %v418 = vld [vmem:[%s298 + $0x128] sm:$0xff]
        %v419 = vld [vmem:[%s298 + $0x130] sm:$0xff]
        %v420 = vld [vmem:[%s298 + $0x138] sm:$0xff]
        %v421 = vld [vmem:[%s298 + $0x140] sm:$0xff]
        %v422 = vld [vmem:[%s298 + $0x148] sm:$0xff]
        %v423 = vld [vmem:[%s298 + $0x150] sm:$0xff]
        %v424 = vld [vmem:[%s298 + $0x158] sm:$0xff]
        %v425 = vld [vmem:[%s298 + $0x160] sm:$0xff]
        %v426 = vld [vmem:[%s298 + $0x168] sm:$0xff]
        %v427 = vld [vmem:[%s298 + $0x170] sm:$0xff]
        %v428 = vld [vmem:[%s298 + $0x178] sm:$0xff]
        %v429 = vld [vmem:[%s298 + $0x180] sm:$0xff]
        %v430 = vld [vmem:[%s298 + $0x188] sm:$0xff]
        %v431 = vld [vmem:[%s298 + $0x190] sm:$0xff]
        %v432 = vld [vmem:[%s298 + $0x198] sm:$0xff]
        %v433 = vld [vmem:[%s298 + $0x1a0] sm:$0xff]
        %v434 = vld [vmem:[%s298 + $0x1a8] sm:$0xff]
        %v435 = vld [vmem:[%s298 + $0x1b0] sm:$0xff]
        %v436 = vld [vmem:[%s298 + $0x1b8] sm:$0xff]
        %v437 = vld [vmem:[%s298 + $0x1c0] sm:$0xff]
        %v438 = vld [vmem:[%s298 + $0x1c8] sm:$0xff]
        %v439 = vld [vmem:[%s298 + $0x1d0] sm:$0xff]
        %v440 = vld [vmem:[%s298 + $0x1d8] sm:$0xff]
        %v441 = vld [vmem:[%s298 + $0x1e0] sm:$0xff]
        %v442 = vld [vmem:[%s298 + $0x1e8] sm:$0xff]
        %v443 = vld [vmem:[%s298 + $0x1f0] sm:$0xff]
        %v444 = vld [vmem:[%s298 + $0x1f8] sm:$0xff]
        %v445 = vld [vmem:[%s298 + $0x200] sm:$0xff]
        %v446 = vld [vmem:[%s298 + $0x208] sm:$0xff]
        %v447 = vld [vmem:[%s298 + $0x210] sm:$0xff]
        %v448 = vld [vmem:[%s298 + $0x218] sm:$0xff]
        %v449 = vld [vmem:[%s298 + $0x220] sm:$0xff]
        %v450 = vld [vmem:[%s298 + $0x228] sm:$0xff]
        %v451 = vld [vmem:[%s298 + $0x230] sm:$0xff]
        %v452 = vld [vmem:[%s298 + $0x238] sm:$0xff]
        %v453 = vld [vmem:[%s298 + $0x240] sm:$0xff]
        %v454 = vld [vmem:[%s298 + $0x248] sm:$0xff]
        %v455 = vld [vmem:[%s298 + $0x250] sm:$0xff]
        %v456 = vld [vmem:[%s298 + $0x258] sm:$0xff]
        %v457 = vld [vmem:[%s298 + $0x260] sm:$0xff]
        %v458 = vld [vmem:[%s298 + $0x268] sm:$0xff]
        %v459 = vld [vmem:[%s298 + $0x270] sm:$0xff]
        %v460 = vld [vmem:[%s298 + $0x278] sm:$0xff]
        %v461 = vld [vmem:[%s298 + $0x280] sm:$0xff]
        %v462 = vld [vmem:[%s298 + $0x288] sm:$0xff]
        %v463 = vld [vmem:[%s298 + $0x290] sm:$0xff]
        %v464 = vld [vmem:[%s298 + $0x298] sm:$0xff]
        %v465 = vld [vmem:[%s298 + $0x2a0] sm:$0xff]
        %v466 = vld [vmem:[%s298 + $0x2a8] sm:$0xff]
        %v467 = vld [vmem:[%s298 + $0x2b0] sm:$0xff]
        %v468 = vld [vmem:[%s298 + $0x2b8] sm:$0xff]
        %v469 = vld [vmem:[%s298 + $0x2c0] sm:$0xff]
        %v470 = vld [vmem:[%s298 + $0x2c8] sm:$0xff]
        %v471 = vld [vmem:[%s298 + $0x2d0] sm:$0xff]
        %v472 = vld [vmem:[%s298 + $0x2d8] sm:$0xff]
        %v473 = vld [vmem:[%s298 + $0x2e0] sm:$0xff]
        %v474 = vld [vmem:[%s298 + $0x2e8] sm:$0xff]
        %v475 = vld [vmem:[%s298 + $0x2f0] sm:$0xff]
        %v476 = vld [vmem:[%s298 + $0x2f8] sm:$0xff]
        %v477 = vld [vmem:[%s298 + $0x300] sm:$0xff]
        %v478 = vld [vmem:[%s298 + $0x308] sm:$0xff]
        %v479 = vld [vmem:[%s298 + $0x310] sm:$0xff]
        %v480 = vld [vmem:[%s298 + $0x318] sm:$0xff]
        %v481 = vld [vmem:[%s298 + $0x320] sm:$0xff]
        %v482 = vld [vmem:[%s298 + $0x328] sm:$0xff]
        %v483 = vld [vmem:[%s298 + $0x330] sm:$0xff]
        %v484 = vld [vmem:[%s298 + $0x338] sm:$0xff]
        %v485 = vld [vmem:[%s298 + $0x340] sm:$0xff]
        %v486 = vld [vmem:[%s298 + $0x348] sm:$0xff]
        %v487 = vld [vmem:[%s298 + $0x350] sm:$0xff]
        %v488 = vld [vmem:[%s298 + $0x358] sm:$0xff]
        %v489 = vld [vmem:[%s298 + $0x360] sm:$0xff]
        %v490 = vld [vmem:[%s298 + $0x368] sm:$0xff]
        %v491 = vld [vmem:[%s298 + $0x370] sm:$0xff]
        %v492 = vld [vmem:[%s298 + $0x378] sm:$0xff]
        %v493 = vld [vmem:[%s298 + $0x380] sm:$0xff]
        %v494 = vld [vmem:[%s298 + $0x388] sm:$0xff]
        %v495 = vld [vmem:[%s298 + $0x390] sm:$0xff]
        %v496 = vld [vmem:[%s298 + $0x398] sm:$0xff]
        %v497 = vld [vmem:[%s298 + $0x3a0] sm:$0xff]
        %v498 = vld [vmem:[%s298 + $0x3a8] sm:$0xff]
        %v499 = vld [vmem:[%s298 + $0x3b0] sm:$0xff]
        %v500 = vld [vmem:[%s298 + $0x3b8] sm:$0xff]
        %v501 = vld [vmem:[%s298 + $0x3c0] sm:$0xff]
        %v502 = vld [vmem:[%s298 + $0x3c8] sm:$0xff]
        %v503 = vld [vmem:[%s298 + $0x3d0] sm:$0xff]
        %v504 = vld [vmem:[%s298 + $0x3d8] sm:$0xff]
        %v505 = vld [vmem:[%s298 + $0x3e0] sm:$0xff]
        %v506 = vld [vmem:[%s298 + $0x3e8] sm:$0xff]
        %v507 = vld [vmem:[%s298 + $0x3f0] sm:$0xff]
        %v508 = vld [vmem:[%s298 + $0x3f8] sm:$0xff]
        %v509 = vld [vmem:[%s298 + $0x400] sm:$0xff]
        %v510 = vld [vmem:[%s298 + $0x408] sm:$0xff]
        %v511 = vld [vmem:[%s298 + $0x410] sm:$0xff]
        %v512 = vld [vmem:[%s298 + $0x418] sm:$0xff]
        %v513 = vld [vmem:[%s298 + $0x420] sm:$0xff]
        %v514 = vld [vmem:[%s298 + $0x428] sm:$0xff]
        %v515 = vld [vmem:[%s298 + $0x430] sm:$0xff]
        %v516 = vld [vmem:[%s298 + $0x438] sm:$0xff]
        %v517 = vld [vmem:[%s298 + $0x440] sm:$0xff]
        %v518 = vld [vmem:[%s298 + $0x448] sm:$0xff]
        %v519 = vld [vmem:[%s298 + $0x450] sm:$0xff]
        %v520 = vld [vmem:[%s298 + $0x458] sm:$0xff]
        %v521 = vld [vmem:[%s298 + $0x460] sm:$0xff]
        %v522 = vld [vmem:[%s298 + $0x468] sm:$0xff]
        %v523 = vld [vmem:[%s298 + $0x470] sm:$0xff]
        %v524 = vld [vmem:[%s298 + $0x478] sm:$0xff]
        %v525 = vld [vmem:[%s298 + $0x480] sm:$0xff]
        %v526 = vld [vmem:[%s298 + $0x488] sm:$0xff]
        %v527 = vld [vmem:[%s298 + $0x490] sm:$0xff]
        %v528 = vld [vmem:[%s298 + $0x498] sm:$0xff]
        %v529 = vld [vmem:[%s298 + $0x4a0] sm:$0xff]
        %v530 = vld [vmem:[%s298 + $0x4a8] sm:$0xff]
        %v531 = vld [vmem:[%s298 + $0x4b0] sm:$0xff]
        %v532 = vld [vmem:[%s298 + $0x4b8] sm:$0xff]
        %v533 = vld [vmem:[%s298 + $0x4c0] sm:$0xff]
        %v534 = vld [vmem:[%s298 + $0x4c8] sm:$0xff]
        %v535 = vld [vmem:[%s298 + $0x4d0] sm:$0xff]
        %v536 = vld [vmem:[%s298 + $0x4d8] sm:$0xff]
        %v537 = vld [vmem:[%s298 + $0x4e0] sm:$0xff]
        %v538 = vld [vmem:[%s298 + $0x4e8] sm:$0xff]
        %v539 = vld [vmem:[%s298 + $0x4f0] sm:$0xff]
        %v540 = vld [vmem:[%s298 + $0x4f8] sm:$0xff]
        %v541 = vld [vmem:[%s298 + $0x500] sm:$0xff]
        %v542 = vld [vmem:[%s298 + $0x508] sm:$0xff]
        %v543 = vld [vmem:[%s298 + $0x510] sm:$0xff]
        %v544 = vld [vmem:[%s298 + $0x518] sm:$0xff]
        %v545 = vld [vmem:[%s298 + $0x520] sm:$0xff]
        %v546 = vld [vmem:[%s298 + $0x528] sm:$0xff]
        %v547 = vld [vmem:[%s298 + $0x530] sm:$0xff]
        %v548 = vld [vmem:[%s298 + $0x538] sm:$0xff]
        %v549 = vld [vmem:[%s298 + $0x540] sm:$0xff]
        %v550 = vld [vmem:[%s298 + $0x548] sm:$0xff]
        %v551 = vld [vmem:[%s298 + $0x550] sm:$0xff]
        %v552 = vld [vmem:[%s298 + $0x558] sm:$0xff]
        %v553 = vld [vmem:[%s298 + $0x560] sm:$0xff]
        %v554 = vld [vmem:[%s298 + $0x568] sm:$0xff]
        %v555 = vld [vmem:[%s298 + $0x570] sm:$0xff]
        %v556 = vld [vmem:[%s298 + $0x578] sm:$0xff]
        %v557 = vld [vmem:[%s298 + $0x580] sm:$0xff]
        %v558 = vld [vmem:[%s298 + $0x588] sm:$0xff]
        %v559 = vld [vmem:[%s298 + $0x590] sm:$0xff]
        %v560 = vld [vmem:[%s298 + $0x598] sm:$0xff]
        %v561 = vld [vmem:[%s298 + $0x5a0] sm:$0xff]
        %v562 = vld [vmem:[%s298 + $0x5a8] sm:$0xff]
        %v563 = vld [vmem:[%s298 + $0x5b0] sm:$0xff]
        %v564 = vld [vmem:[%s298 + $0x5b8] sm:$0xff]
        %v565 = vld [vmem:[%s298 + $0x5c0] sm:$0xff]
        %v566 = vld [vmem:[%s298 + $0x5c8] sm:$0xff]
        %v567 = vld [vmem:[%s298 + $0x5d0] sm:$0xff]
        %v568 = vld [vmem:[%s298 + $0x5d8] sm:$0xff]
        %v569 = vld [vmem:[%s298 + $0x5e0] sm:$0xff]
        %v570 = vld [vmem:[%s298 + $0x5e8] sm:$0xff]
        %v571 = vld [vmem:[%s298 + $0x5f0] sm:$0xff]
        %v572 = vld [vmem:[%s298 + $0x5f8] sm:$0xff]
        %v573 = vld [vmem:[%s298 + $0x600] sm:$0xff]
        %v574 = vld [vmem:[%s298 + $0x608] sm:$0xff]
        %v575 = vld [vmem:[%s298 + $0x610] sm:$0xff]
        %v576 = vld [vmem:[%s298 + $0x618] sm:$0xff]
        %v577 = vld [vmem:[%s298 + $0x620] sm:$0xff]
        %v578 = vld [vmem:[%s298 + $0x628] sm:$0xff]
        %v579 = vld [vmem:[%s298 + $0x630] sm:$0xff]
        %v580 = vld [vmem:[%s298 + $0x638] sm:$0xff]
        %v581 = vld [vmem:[%s298 + $0x640] sm:$0xff]
        %v582 = vld [vmem:[%s298 + $0x648] sm:$0xff]
        %v583 = vld [vmem:[%s298 + $0x650] sm:$0xff]
        %v584 = vld [vmem:[%s298 + $0x658] sm:$0xff]
        %v585 = vld [vmem:[%s298 + $0x660] sm:$0xff]
        %v586 = vld [vmem:[%s298 + $0x668] sm:$0xff]
        %v587 = vld [vmem:[%s298 + $0x670] sm:$0xff]
        %v588 = vld [vmem:[%s298 + $0x678] sm:$0xff]
        %v589 = vld [vmem:[%s298 + $0x680] sm:$0xff]
        %v590 = vld [vmem:[%s298 + $0x688] sm:$0xff]
        %v591 = vld [vmem:[%s298 + $0x690] sm:$0xff]
        %v592 = vld [vmem:[%s298 + $0x698] sm:$0xff]
        %v593 = vld [vmem:[%s298 + $0x6a0] sm:$0xff]
        %v594 = vld [vmem:[%s298 + $0x6a8] sm:$0xff]
        %v595 = vld [vmem:[%s298 + $0x6b0] sm:$0xff]
        %v596 = vld [vmem:[%s298 + $0x6b8] sm:$0xff]
        %v597 = vld [vmem:[%s298 + $0x6c0] sm:$0xff]
        %v598 = vld [vmem:[%s298 + $0x6c8] sm:$0xff]
        %v599 = vld [vmem:[%s298 + $0x6d0] sm:$0xff]
        %v600 = vld [vmem:[%s298 + $0x6d8] sm:$0xff]
        %v601 = vld [vmem:[%s298 + $0x6e0] sm:$0xff]
        %v602 = vld [vmem:[%s298 + $0x6e8] sm:$0xff]
        %v603 = vld [vmem:[%s298 + $0x6f0] sm:$0xff]
        %v604 = vld [vmem:[%s298 + $0x6f8] sm:$0xff]
        %v605 = vld [vmem:[%s298 + $0x700] sm:$0xff]
        %v606 = vld [vmem:[%s298 + $0x708] sm:$0xff]
        %v607 = vld [vmem:[%s298 + $0x710] sm:$0xff]
        %v608 = vld [vmem:[%s298 + $0x718] sm:$0xff]
        %v609 = vld [vmem:[%s298 + $0x720] sm:$0xff]
        %v610 = vld [vmem:[%s298 + $0x728] sm:$0xff]
        %v611 = vld [vmem:[%s298 + $0x730] sm:$0xff]
        %v612 = vld [vmem:[%s298 + $0x738] sm:$0xff]
        %v613 = vld [vmem:[%s298 + $0x740] sm:$0xff]
        %v614 = vld [vmem:[%s298 + $0x748] sm:$0xff]
        %v615 = vld [vmem:[%s298 + $0x750] sm:$0xff]
        %v616 = vld [vmem:[%s298 + $0x758] sm:$0xff]
        %v617 = vld [vmem:[%s298 + $0x760] sm:$0xff]
        %v618 = vld [vmem:[%s298 + $0x768] sm:$0xff]
        %v619 = vld [vmem:[%s298 + $0x770] sm:$0xff]
        %v620 = vld [vmem:[%s298 + $0x778] sm:$0xff]
        %v621 = vld [vmem:[%s298 + $0x780] sm:$0xff]
        %v622 = vld [vmem:[%s298 + $0x788] sm:$0xff]
        %v623 = vld [vmem:[%s298 + $0x790] sm:$0xff]
        %v624 = vld [vmem:[%s298 + $0x798] sm:$0xff]
        %v625 = vld [vmem:[%s298 + $0x7a0] sm:$0xff]
        %v626 = vld [vmem:[%s298 + $0x7a8] sm:$0xff]
        %v627 = vld [vmem:[%s298 + $0x7b0] sm:$0xff]
        %v628 = vld [vmem:[%s298 + $0x7b8] sm:$0xff]
        %v629 = vld [vmem:[%s298 + $0x7c0] sm:$0xff]
        %v630 = vld [vmem:[%s298 + $0x7c8] sm:$0xff]
        %v631 = vld [vmem:[%s298 + $0x7d0] sm:$0xff]
        %v632 = vld [vmem:[%s298 + $0x7d8] sm:$0xff]
        %v633 = vld [vmem:[%s298 + $0x7e0] sm:$0xff]
        %v634 = vld [vmem:[%s298 + $0x7e8] sm:$0xff]
        %v635 = vld [vmem:[%s298 + $0x7f0] sm:$0xff]
        %v636 = vld [vmem:[%s298 + $0x7f8] sm:$0xff]
        %v637 = vld [vmem:[%s298 + $0x800] sm:$0xff]
        %v638 = vld [vmem:[%s298 + $0x808] sm:$0xff]
        %v639 = vld [vmem:[%s298 + $0x810] sm:$0xff]
        %v640 = vld [vmem:[%s298 + $0x818] sm:$0xff]
        %v641 = vld [vmem:[%s298 + $0x820] sm:$0xff]
        %v642 = vld [vmem:[%s298 + $0x828] sm:$0xff]
        %v643 = vld [vmem:[%s298 + $0x830] sm:$0xff]
        %v644 = vld [vmem:[%s298 + $0x838] sm:$0xff]
        %v645 = vld [vmem:[%s298 + $0x840] sm:$0xff]
        %v646 = vld [vmem:[%s298 + $0x848] sm:$0xff]
        %v647 = vld [vmem:[%s298 + $0x850] sm:$0xff]
        %v648 = vld [vmem:[%s298 + $0x858] sm:$0xff]
        %v649 = vld [vmem:[%s298 + $0x860] sm:$0xff]
        %v650 = vld [vmem:[%s298 + $0x868] sm:$0xff]
        %v651 = vld [vmem:[%s298 + $0x870] sm:$0xff]
        %v652 = vld [vmem:[%s298 + $0x878] sm:$0xff]
        %v653 = vld [vmem:[%s298 + $0x880] sm:$0xff]
        %v654 = vld [vmem:[%s298 + $0x888] sm:$0xff]
        %v655 = vld [vmem:[%s298 + $0x890] sm:$0xff]
        %v656 = vld [vmem:[%s298 + $0x898] sm:$0xff]
        %v657 = vld [vmem:[%s298 + $0x8a0] sm:$0xff]
        %v658 = vld [vmem:[%s298 + $0x8a8] sm:$0xff]
        %v659 = vld [vmem:[%s298 + $0x8b0] sm:$0xff]
        %v660 = vld [vmem:[%s298 + $0x8b8] sm:$0xff]
        %v661 = vld [vmem:[%s298 + $0x8c0] sm:$0xff]
        %v662 = vld [vmem:[%s298 + $0x8c8] sm:$0xff]
        %v663 = vld [vmem:[%s298 + $0x8d0] sm:$0xff]
        %v664 = vld [vmem:[%s298 + $0x8d8] sm:$0xff]
        %v665 = vld [vmem:[%s298 + $0x8e0] sm:$0xff]
        %v666 = vld [vmem:[%s298 + $0x8e8] sm:$0xff]
        %v667 = vld [vmem:[%s298 + $0x8f0] sm:$0xff]
        %v668 = vld [vmem:[%s298 + $0x8f8] sm:$0xff]
        %v669 = vld [vmem:[%s298 + $0x900] sm:$0xff]
        %v670 = vld [vmem:[%s298 + $0x908] sm:$0xff]
        %v671 = vld [vmem:[%s298 + $0x910] sm:$0xff]
        %v672 = vld [vmem:[%s298 + $0x918] sm:$0xff]
        %v673 = vld [vmem:[%s298 + $0x920] sm:$0xff]
        %v674 = vld [vmem:[%s298 + $0x928] sm:$0xff]
        %v675 = vld [vmem:[%s298 + $0x930] sm:$0xff]
        %v676 = vld [vmem:[%s298 + $0x938] sm:$0xff]
        %v677 = vld [vmem:[%s298 + $0x940] sm:$0xff]
        %v678 = vld [vmem:[%s298 + $0x948] sm:$0xff]
        %v679 = vld [vmem:[%s298 + $0x950] sm:$0xff]
        %v680 = vld [vmem:[%s298 + $0x958] sm:$0xff]
        %v681 = vld [vmem:[%s298 + $0x960] sm:$0xff]
        %v682 = vld [vmem:[%s298 + $0x968] sm:$0xff]
        %v683 = vld [vmem:[%s298 + $0x970] sm:$0xff]
        %v684 = vld [vmem:[%s298 + $0x978] sm:$0xff]
        %v685 = vld [vmem:[%s298 + $0x980] sm:$0xff]
        %v686 = vld [vmem:[%s298 + $0x988] sm:$0xff]
        %v687 = vld [vmem:[%s298 + $0x990] sm:$0xff]
        %v688 = vld [vmem:[%s298 + $0x998] sm:$0xff]
        %v689 = vld [vmem:[%s298 + $0x9a0] sm:$0xff]
        %v690 = vld [vmem:[%s298 + $0x9a8] sm:$0xff]
        %v691 = vld [vmem:[%s298 + $0x9b0] sm:$0xff]
        %v692 = vld [vmem:[%s298 + $0x9b8] sm:$0xff]
        %v693 = vld [vmem:[%s298 + $0x9c0] sm:$0xff]
        %v694 = vld [vmem:[%s298 + $0x9c8] sm:$0xff]
        %v695 = vld [vmem:[%s298 + $0x9d0] sm:$0xff]
        %v696 = vld [vmem:[%s298 + $0x9d8] sm:$0xff]
        %v697 = vld [vmem:[%s298 + $0x9e0] sm:$0xff]
        %v698 = vld [vmem:[%s298 + $0x9e8] sm:$0xff]
        %v699 = vld [vmem:[%s298 + $0x9f0] sm:$0xff]
        %v700 = vld [vmem:[%s298 + $0x9f8] sm:$0xff]
        %v701 = vld [vmem:[%s298 + $0xa00] sm:$0xff]
        %v702 = vld [vmem:[%s298 + $0xa08] sm:$0xff]
        %v703 = vld [vmem:[%s298 + $0xa10] sm:$0xff]
        %v704 = vld [vmem:[%s298 + $0xa18] sm:$0xff]
        %v705 = vld [vmem:[%s298 + $0xa20] sm:$0xff]
        %v706 = vld [vmem:[%s298 + $0xa28] sm:$0xff]
        %v707 = vld [vmem:[%s298 + $0xa30] sm:$0xff]
        %v708 = vld [vmem:[%s298 + $0xa38] sm:$0xff]
        %v709 = vld [vmem:[%s298 + $0xa40] sm:$0xff]
        %v710 = vld [vmem:[%s298 + $0xa48] sm:$0xff]
        %v711 = vld [vmem:[%s298 + $0xa50] sm:$0xff]
        %v712 = vld [vmem:[%s298 + $0xa58] sm:$0xff]
        %v713 = vld [vmem:[%s298 + $0xa60] sm:$0xff]
        %v714 = vld [vmem:[%s298 + $0xa68] sm:$0xff]
        %v715 = vld [vmem:[%s298 + $0xa70] sm:$0xff]
        %v716 = vld [vmem:[%s298 + $0xa78] sm:$0xff]
        %v717 = vld [vmem:[%s298 + $0xa80] sm:$0xff]
        %v718 = vld [vmem:[%s298 + $0xa88] sm:$0xff]
        %v719 = vld [vmem:[%s298 + $0xa90] sm:$0xff]
        %v720 = vld [vmem:[%s298 + $0xa98] sm:$0xff]
        %v721 = vld [vmem:[%s298 + $0xaa0] sm:$0xff]
        %v722 = vld [vmem:[%s298 + $0xaa8] sm:$0xff]
        %v723 = vld [vmem:[%s298 + $0xab0] sm:$0xff]
        %v724 = vld [vmem:[%s298 + $0xab8] sm:$0xff]
        %v725 = vld [vmem:[%s298 + $0xac0] sm:$0xff]
        %v726 = vld [vmem:[%s298 + $0xac8] sm:$0xff]
        %v727 = vld [vmem:[%s298 + $0xad0] sm:$0xff]
        %v728 = vld [vmem:[%s298 + $0xad8] sm:$0xff]
        %v729 = vld [vmem:[%s298 + $0xae0] sm:$0xff]
        %v730 = vld [vmem:[%s298 + $0xae8] sm:$0xff]
        %v731 = vld [vmem:[%s298 + $0xaf0] sm:$0xff]
        %v732 = vld [vmem:[%s298 + $0xaf8] sm:$0xff]
        %v733 = vld [vmem:[%s298 + $0xb00] sm:$0xff]
        %v734 = vld [vmem:[%s298 + $0xb08] sm:$0xff]
        %v735 = vld [vmem:[%s298 + $0xb10] sm:$0xff]
        %v736 = vld [vmem:[%s298 + $0xb18] sm:$0xff]
        %v737 = vld [vmem:[%s298 + $0xb20] sm:$0xff]
        %v738 = vld [vmem:[%s298 + $0xb28] sm:$0xff]
        %v739 = vld [vmem:[%s298 + $0xb30] sm:$0xff]
        %v740 = vld [vmem:[%s298 + $0xb38] sm:$0xff]
        %v741 = vld [vmem:[%s298 + $0xb40] sm:$0xff]
        %v742 = vld [vmem:[%s298 + $0xb48] sm:$0xff]
        %v743 = vld [vmem:[%s298 + $0xb50] sm:$0xff]
        %v744 = vld [vmem:[%s298 + $0xb58] sm:$0xff]
        %v745 = vld [vmem:[%s298 + $0xb60] sm:$0xff]
        %v746 = vld [vmem:[%s298 + $0xb68] sm:$0xff]
        %v747 = vld [vmem:[%s298 + $0xb70] sm:$0xff]
        %v748 = vld [vmem:[%s298 + $0xb78] sm:$0xff]
        %v749 = vld [vmem:[%s298 + $0xb80] sm:$0xff]
        %v750 = vld [vmem:[%s298 + $0xb88] sm:$0xff]
        %v751 = vld [vmem:[%s298 + $0xb90] sm:$0xff]
        %v752 = vld [vmem:[%s298 + $0xb98] sm:$0xff]
        %v753 = vld [vmem:[%s298 + $0xba0] sm:$0xff]
        %v754 = vld [vmem:[%s298 + $0xba8] sm:$0xff]
        %v755 = vld [vmem:[%s298 + $0xbb0] sm:$0xff]
        %v756 = vld [vmem:[%s298 + $0xbb8] sm:$0xff]
        %v757 = vld [vmem:[%s298 + $0xbc0] sm:$0xff]
        %v758 = vld [vmem:[%s298 + $0xbc8] sm:$0xff]
        %v759 = vld [vmem:[%s298 + $0xbd0] sm:$0xff]
        %v760 = vld [vmem:[%s298 + $0xbd8] sm:$0xff]
        %v761 = vld [vmem:[%s298 + $0xbe0] sm:$0xff]
        %v762 = vld [vmem:[%s298 + $0xbe8] sm:$0xff]
        %v763 = vld [vmem:[%s298 + $0xbf0] sm:$0xff]
        %v764 = vld [vmem:[%s298 + $0xbf8] sm:$0xff]
        %v765 = vld [vmem:[%s307] sm:$0xf]
        %v767 = vlaneseq
        %v768 = vshrl.u32 %v767, 7
        %v769 = vsub.s32 0, %v768
        %v770 = vrot.slane %v765, %v769
        %v771 = vlaneseq
        %v772 = vshrl.u32 %v771, 7
        %v773 = vsub.s32 1, %v772
        %v774 = vrot.slane %v765, %v773
        %v775 = vlaneseq
        %v776 = vshrl.u32 %v775, 7
        %v777 = vsub.s32 2, %v776
        %v778 = vrot.slane %v765, %v777
        %v779 = vlaneseq
        %v780 = vshrl.u32 %v779, 7
        %v781 = vsub.s32 3, %v780
        %v782 = vrot.slane %v765, %v781
        %787 = vmatprep.subr.mxu0 %v382
        %788 = vmatpush1.msra.mxu0 %v381
        %789 = vmatprep.subr.mxu0 %v386
        %790 = vmatpush1.msra.mxu0 %v385
        %791 = vmatprep.subr.mxu0 %v390
        %792 = vmatpush1.msra.mxu0 %v389
        %793 = vmatprep.subr.mxu0 %v394
        %794 = vmatpush1.msra.mxu0 %v393
        %795 = vmatprep.subr.mxu0 %v398
        %796 = vmatpush1.msra.mxu0 %v397
        %797 = vmatprep.subr.mxu0 %v402
        %798 = vmatpush1.msra.mxu0 %v401
        %799 = vmatprep.subr.mxu0 %v406
        %800 = vmatpush1.msra.mxu0 %v405
        %801 = vmatprep.subr.mxu0 %v410
        %802 = vmatpush1.msra.mxu0 %v409
        %803 = vmatprep.subr.mxu0 %v414
        %804 = vmatpush1.msra.mxu0 %v413
        %805 = vmatprep.subr.mxu0 %v418
        %806 = vmatpush1.msra.mxu0 %v417
        %807 = vmatprep.subr.mxu0 %v422
        %808 = vmatpush1.msra.mxu0 %v421
        %809 = vmatprep.subr.mxu0 %v426
        %810 = vmatpush1.msra.mxu0 %v425
        %811 = vmatprep.subr.mxu0 %v430
        %812 = vmatpush1.msra.mxu0 %v429
        %813 = vmatprep.subr.mxu0 %v434
        %814 = vmatpush1.msra.mxu0 %v433
        %815 = vmatprep.subr.mxu0 %v438
        %816 = vmatpush1.msra.mxu0 %v437
        %817 = vmatprep.subr.mxu0 %v442
        %818 = vmatpush1.msra.mxu0 %v441
        %819 = vmatprep.subr.mxu0 %v446
        %820 = vmatpush1.msra.mxu0 %v445
        %821 = vmatprep.subr.mxu0 %v450
        %822 = vmatpush1.msra.mxu0 %v449
        %823 = vmatprep.subr.mxu0 %v454
        %824 = vmatpush1.msra.mxu0 %v453
        %825 = vmatprep.subr.mxu0 %v458
        %826 = vmatpush1.msra.mxu0 %v457
        %827 = vmatprep.subr.mxu0 %v462
        %828 = vmatpush1.msra.mxu0 %v461
        %829 = vmatprep.subr.mxu0 %v466
        %830 = vmatpush1.msra.mxu0 %v465
        %831 = vmatprep.subr.mxu0 %v470
        %832 = vmatpush1.msra.mxu0 %v469
        %833 = vmatprep.subr.mxu0 %v474
        %834 = vmatpush1.msra.mxu0 %v473
        %835 = vmatprep.subr.mxu0 %v478
        %836 = vmatpush1.msra.mxu0 %v477
        %837 = vmatprep.subr.mxu0 %v482
        %838 = vmatpush1.msra.mxu0 %v481
        %839 = vmatprep.subr.mxu0 %v486
        %840 = vmatpush1.msra.mxu0 %v485
        %841 = vmatprep.subr.mxu0 %v490
        %842 = vmatpush1.msra.mxu0 %v489
        %843 = vmatprep.subr.mxu0 %v494
        %844 = vmatpush1.msra.mxu0 %v493
        %845 = vmatprep.subr.mxu0 %v498
        %846 = vmatpush1.msra.mxu0 %v497
        %847 = vmatprep.subr.mxu0 %v502
        %848 = vmatpush1.msra.mxu0 %v501
        %849 = vmatprep.subr.mxu0 %v506
        %850 = vmatpush1.msra.mxu0 %v505
        %851 = vmatprep.mubr.f32.mxu0 %v370
        %852 = vmatmul.mubr.f32.gmra.mrb[0].mxu0 %v369
        %v853 = vpop.f32.mrb[0].mxu0
        %v854 = vadd.f32 %v770, %v853
        %v855 = vpop.f32.mrb[0].mxu0
        %v856 = vadd.f32 %v774, %v855
        %857 = vmatprep.mubr.f32.mxu0 %v376
        %858 = vmatmul.mubr.f32.gmra.mrb[0].mxu0 %v375
        %v859 = vpop.f32.mrb[0].mxu0
        %v860 = vadd.f32 %v770, %v859
        %v861 = vpop.f32.mrb[0].mxu0
        %v862 = vadd.f32 %v774, %v861
        %863 = vdwg.mxu0
        %864 = vmatprep.subr.mxu0 %v510
        %865 = vmatpush1.msra.mxu0 %v509
        %866 = vmatprep.subr.mxu0 %v514
        %867 = vmatpush1.msra.mxu0 %v513
        %868 = vmatprep.subr.mxu0 %v518
        %869 = vmatpush1.msra.mxu0 %v517
        %870 = vmatprep.subr.mxu0 %v522
        %871 = vmatpush1.msra.mxu0 %v521
        %872 = vmatprep.subr.mxu0 %v526
        %873 = vmatpush1.msra.mxu0 %v525
        %874 = vmatprep.subr.mxu0 %v530
        %875 = vmatpush1.msra.mxu0 %v529
        %876 = vmatprep.subr.mxu0 %v534
        %877 = vmatpush1.msra.mxu0 %v533
        %878 = vmatprep.subr.mxu0 %v538
        %879 = vmatpush1.msra.mxu0 %v537
        %880 = vmatprep.subr.mxu0 %v542
        %881 = vmatpush1.msra.mxu0 %v541
        %882 = vmatprep.subr.mxu0 %v546
        %883 = vmatpush1.msra.mxu0 %v545
        %884 = vmatprep.subr.mxu0 %v550
        %885 = vmatpush1.msra.mxu0 %v549
        %886 = vmatprep.subr.mxu0 %v554
        %887 = vmatpush1.msra.mxu0 %v553
        %888 = vmatprep.subr.mxu0 %v558
        %889 = vmatpush1.msra.mxu0 %v557
        %890 = vmatprep.subr.mxu0 %v562
        %891 = vmatpush1.msra.mxu0 %v561
        %892 = vmatprep.subr.mxu0 %v566
        %893 = vmatpush1.msra.mxu0 %v565
        %894 = vmatprep.subr.mxu0 %v570
        %895 = vmatpush1.msra.mxu0 %v569
        %896 = vmatprep.subr.mxu0 %v574
        %897 = vmatpush1.msra.mxu0 %v573
        %898 = vmatprep.subr.mxu0 %v578
        %899 = vmatpush1.msra.mxu0 %v577
        %900 = vmatprep.subr.mxu0 %v582
        %901 = vmatpush1.msra.mxu0 %v581
        %902 = vmatprep.subr.mxu0 %v586
        %903 = vmatpush1.msra.mxu0 %v585
        %904 = vmatprep.subr.mxu0 %v590
        %905 = vmatpush1.msra.mxu0 %v589
        %906 = vmatprep.subr.mxu0 %v594
        %907 = vmatpush1.msra.mxu0 %v593
        %908 = vmatprep.subr.mxu0 %v598
        %909 = vmatpush1.msra.mxu0 %v597
        %910 = vmatprep.subr.mxu0 %v602
        %911 = vmatpush1.msra.mxu0 %v601
        %912 = vmatprep.subr.mxu0 %v606
        %913 = vmatpush1.msra.mxu0 %v605
        %914 = vmatprep.subr.mxu0 %v610
        %915 = vmatpush1.msra.mxu0 %v609
        %916 = vmatprep.subr.mxu0 %v614
        %917 = vmatpush1.msra.mxu0 %v613
        %918 = vmatprep.subr.mxu0 %v618
        %919 = vmatpush1.msra.mxu0 %v617
        %920 = vmatprep.subr.mxu0 %v622
        %921 = vmatpush1.msra.mxu0 %v621
        %922 = vmatprep.subr.mxu0 %v626
        %923 = vmatpush1.msra.mxu0 %v625
        %924 = vmatprep.subr.mxu0 %v630
        %925 = vmatpush1.msra.mxu0 %v629
        %926 = vmatprep.subr.mxu0 %v634
        %927 = vmatpush1.msra.mxu0 %v633
        %928 = vmatprep.mubr.f32.mxu0 %v372
        %929 = vmatmul.mubr.f32.gmra.mrb[0].mxu0 %v371
        %v930 = vpop.f32.mrb[0].mxu0
        %v931 = vadd.f32 %v854, %v930
        %v932 = vpop.f32.mrb[0].mxu0
        %v933 = vadd.f32 %v856, %v932
        %934 = vmatprep.mubr.f32.mxu0 %v378
        %935 = vmatmul.mubr.f32.gmra.mrb[0].mxu0 %v377
        %v936 = vpop.f32.mrb[0].mxu0
        %v937 = vadd.f32 %v860, %v936
        %v938 = vpop.f32.mrb[0].mxu0
        %v939 = vadd.f32 %v862, %v938
        %940 = vdwg.mxu0
        %941 = vmatprep.subr.mxu0 %v638
        %942 = vmatpush1.msra.mxu0 %v637
        %943 = vmatprep.subr.mxu0 %v642
        %944 = vmatpush1.msra.mxu0 %v641
        %945 = vmatprep.subr.mxu0 %v646
        %946 = vmatpush1.msra.mxu0 %v645
        %947 = vmatprep.subr.mxu0 %v650
        %948 = vmatpush1.msra.mxu0 %v649
        %949 = vmatprep.subr.mxu0 %v654
        %950 = vmatpush1.msra.mxu0 %v653
        %951 = vmatprep.subr.mxu0 %v658
        %952 = vmatpush1.msra.mxu0 %v657
        %953 = vmatprep.subr.mxu0 %v662
        %954 = vmatpush1.msra.mxu0 %v661
        %955 = vmatprep.subr.mxu0 %v666
        %956 = vmatpush1.msra.mxu0 %v665
        %957 = vmatprep.subr.mxu0 %v670
        %958 = vmatpush1.msra.mxu0 %v669
        %959 = vmatprep.subr.mxu0 %v674
        %960 = vmatpush1.msra.mxu0 %v673
        %961 = vmatprep.subr.mxu0 %v678
        %962 = vmatpush1.msra.mxu0 %v677
        %963 = vmatprep.subr.mxu0 %v682
        %964 = vmatpush1.msra.mxu0 %v681
        %965 = vmatprep.subr.mxu0 %v686
        %966 = vmatpush1.msra.mxu0 %v685
        %967 = vmatprep.subr.mxu0 %v690
        %968 = vmatpush1.msra.mxu0 %v689
        %969 = vmatprep.subr.mxu0 %v694
        %970 = vmatpush1.msra.mxu0 %v693
        %971 = vmatprep.subr.mxu0 %v698
        %972 = vmatpush1.msra.mxu0 %v697
        %973 = vmatprep.subr.mxu0 %v702
        %974 = vmatpush1.msra.mxu0 %v701
        %975 = vmatprep.subr.mxu0 %v706
        %976 = vmatpush1.msra.mxu0 %v705
        %977 = vmatprep.subr.mxu0 %v710
        %978 = vmatpush1.msra.mxu0 %v709
        %979 = vmatprep.subr.mxu0 %v714
        %980 = vmatpush1.msra.mxu0 %v713
        %981 = vmatprep.subr.mxu0 %v718
        %982 = vmatpush1.msra.mxu0 %v717
        %983 = vmatprep.subr.mxu0 %v722
        %984 = vmatpush1.msra.mxu0 %v721
        %985 = vmatprep.subr.mxu0 %v726
        %986 = vmatpush1.msra.mxu0 %v725
        %987 = vmatprep.subr.mxu0 %v730
        %988 = vmatpush1.msra.mxu0 %v729
        %989 = vmatprep.subr.mxu0 %v734
        %990 = vmatpush1.msra.mxu0 %v733
        %991 = vmatprep.subr.mxu0 %v738
        %992 = vmatpush1.msra.mxu0 %v737
        %993 = vmatprep.subr.mxu0 %v742
        %994 = vmatpush1.msra.mxu0 %v741
        %995 = vmatprep.subr.mxu0 %v746
        %996 = vmatpush1.msra.mxu0 %v745
        %997 = vmatprep.subr.mxu0 %v750
        %998 = vmatpush1.msra.mxu0 %v749
        %999 = vmatprep.subr.mxu0 %v754
        %1000 = vmatpush1.msra.mxu0 %v753
        %1001 = vmatprep.subr.mxu0 %v758
        %1002 = vmatpush1.msra.mxu0 %v757
        %1003 = vmatprep.subr.mxu0 %v762
        %1004 = vmatpush1.msra.mxu0 %v761
        %1005 = vmatprep.mubr.f32.mxu0 %v374
        %1006 = vmatmul.mubr.f32.gmra.mrb[0].mxu0 %v373
        %v1007 = vpop.f32.mrb[0].mxu0
        %v1008 = vadd.f32 %v931, %v1007
        %v1009 = vpop.f32.mrb[0].mxu0
        %v1010 = vadd.f32 %v933, %v1009
        %1011 = vmatprep.mubr.f32.mxu0 %v380
        %1012 = vmatmul.mubr.f32.gmra.mrb[0].mxu0 %v379
        %v1013 = vpop.f32.mrb[0].mxu0
        %v1014 = vadd.f32 %v937, %v1013
        %v1015 = vpop.f32.mrb[0].mxu0
        %v1016 = vadd.f32 %v939, %v1015
        %1017 = vdwg.mxu0
        %1018 = vmatprep.subr.mxu0 %v384
        %1019 = vmatpush1.msra.mxu0 %v383
        %1020 = vmatprep.subr.mxu0 %v388
        %1021 = vmatpush1.msra.mxu0 %v387
        %1022 = vmatprep.subr.mxu0 %v392
        %1023 = vmatpush1.msra.mxu0 %v391
        %1024 = vmatprep.subr.mxu0 %v396
        %1025 = vmatpush1.msra.mxu0 %v395
        %1026 = vmatprep.subr.mxu0 %v400
        %1027 = vmatpush1.msra.mxu0 %v399
        %1028 = vmatprep.subr.mxu0 %v404
        %1029 = vmatpush1.msra.mxu0 %v403
        %1030 = vmatprep.subr.mxu0 %v408
        %1031 = vmatpush1.msra.mxu0 %v407
        %1032 = vmatprep.subr.mxu0 %v412
        %1033 = vmatpush1.msra.mxu0 %v411
        %1034 = vmatprep.subr.mxu0 %v416
        %1035 = vmatpush1.msra.mxu0 %v415
        %1036 = vmatprep.subr.mxu0 %v420
        %1037 = vmatpush1.msra.mxu0 %v419
        %1038 = vmatprep.subr.mxu0 %v424
        %1039 = vmatpush1.msra.mxu0 %v423
        %1040 = vmatprep.subr.mxu0 %v428
        %1041 = vmatpush1.msra.mxu0 %v427
        %1042 = vmatprep.subr.mxu0 %v432
        %1043 = vmatpush1.msra.mxu0 %v431
        %1044 = vmatprep.subr.mxu0 %v436
        %1045 = vmatpush1.msra.mxu0 %v435
        %1046 = vmatprep.subr.mxu0 %v440
        %1047 = vmatpush1.msra.mxu0 %v439
        %1048 = vmatprep.subr.mxu0 %v444
        %1049 = vmatpush1.msra.mxu0 %v443
        %1050 = vmatprep.subr.mxu0 %v448
        %1051 = vmatpush1.msra.mxu0 %v447
        %1052 = vmatprep.subr.mxu0 %v452
        %1053 = vmatpush1.msra.mxu0 %v451
        %1054 = vmatprep.subr.mxu0 %v456
        %1055 = vmatpush1.msra.mxu0 %v455
        %1056 = vmatprep.subr.mxu0 %v460
        %1057 = vmatpush1.msra.mxu0 %v459
        %1058 = vmatprep.subr.mxu0 %v464
        %1059 = vmatpush1.msra.mxu0 %v463
        %1060 = vmatprep.subr.mxu0 %v468
        %1061 = vmatpush1.msra.mxu0 %v467
        %1062 = vmatprep.subr.mxu0 %v472
        %1063 = vmatpush1.msra.mxu0 %v471
        %1064 = vmatprep.subr.mxu0 %v476
        %1065 = vmatpush1.msra.mxu0 %v475
        %1066 = vmatprep.subr.mxu0 %v480
        %1067 = vmatpush1.msra.mxu0 %v479
        %1068 = vmatprep.subr.mxu0 %v484
        %1069 = vmatpush1.msra.mxu0 %v483
        %1070 = vmatprep.subr.mxu0 %v488
        %1071 = vmatpush1.msra.mxu0 %v487
        %1072 = vmatprep.subr.mxu0 %v492
        %1073 = vmatpush1.msra.mxu0 %v491
        %1074 = vmatprep.subr.mxu0 %v496
        %1075 = vmatpush1.msra.mxu0 %v495
        %1076 = vmatprep.subr.mxu0 %v500
        %1077 = vmatpush1.msra.mxu0 %v499
        %1078 = vmatprep.subr.mxu0 %v504
        %1079 = vmatpush1.msra.mxu0 %v503
        %1080 = vmatprep.subr.mxu0 %v508
        %1081 = vmatpush1.msra.mxu0 %v507
        %1082 = vmatprep.mubr.f32.mxu0 %v370
        %1083 = vmatmul.mubr.f32.gmra.mrb[0].mxu0 %v369
        %v1084 = vpop.f32.mrb[0].mxu0
        %v1085 = vadd.f32 %v778, %v1084
        %v1086 = vpop.f32.mrb[0].mxu0
        %v1087 = vadd.f32 %v782, %v1086
        %1088 = vmatprep.mubr.f32.mxu0 %v376
        %1089 = vmatmul.mubr.f32.gmra.mrb[0].mxu0 %v375
        %v1090 = vpop.f32.mrb[0].mxu0
        %v1091 = vadd.f32 %v778, %v1090
        %v1092 = vpop.f32.mrb[0].mxu0
        %v1093 = vadd.f32 %v782, %v1092
        %1094 = vdwg.mxu0
        %1095 = vmatprep.subr.mxu0 %v512
        %1096 = vmatpush1.msra.mxu0 %v511
        %1097 = vmatprep.subr.mxu0 %v516
        %1098 = vmatpush1.msra.mxu0 %v515
        %1099 = vmatprep.subr.mxu0 %v520
        %1100 = vmatpush1.msra.mxu0 %v519
        %1101 = vmatprep.subr.mxu0 %v524
        %1102 = vmatpush1.msra.mxu0 %v523
        %1103 = vmatprep.subr.mxu0 %v528
        %1104 = vmatpush1.msra.mxu0 %v527
        %1105 = vmatprep.subr.mxu0 %v532
        %1106 = vmatpush1.msra.mxu0 %v531
        %1107 = vmatprep.subr.mxu0 %v536
        %1108 = vmatpush1.msra.mxu0 %v535
        %1109 = vmatprep.subr.mxu0 %v540
        %1110 = vmatpush1.msra.mxu0 %v539
        %1111 = vmatprep.subr.mxu0 %v544
        %1112 = vmatpush1.msra.mxu0 %v543
        %1113 = vmatprep.subr.mxu0 %v548
        %1114 = vmatpush1.msra.mxu0 %v547
        %1115 = vmatprep.subr.mxu0 %v552
        %1116 = vmatpush1.msra.mxu0 %v551
        %1117 = vmatprep.subr.mxu0 %v556
        %1118 = vmatpush1.msra.mxu0 %v555
        %1119 = vmatprep.subr.mxu0 %v560
        %1120 = vmatpush1.msra.mxu0 %v559
        %1121 = vmatprep.subr.mxu0 %v564
        %1122 = vmatpush1.msra.mxu0 %v563
        %1123 = vmatprep.subr.mxu0 %v568
        %1124 = vmatpush1.msra.mxu0 %v567
        %1125 = vmatprep.subr.mxu0 %v572
        %1126 = vmatpush1.msra.mxu0 %v571
        %1127 = vmatprep.subr.mxu0 %v576
        %1128 = vmatpush1.msra.mxu0 %v575
        %1129 = vmatprep.subr.mxu0 %v580
        %1130 = vmatpush1.msra.mxu0 %v579
        %1131 = vmatprep.subr.mxu0 %v584
        %1132 = vmatpush1.msra.mxu0 %v583
        %1133 = vmatprep.subr.mxu0 %v588
        %1134 = vmatpush1.msra.mxu0 %v587
        %1135 = vmatprep.subr.mxu0 %v592
        %1136 = vmatpush1.msra.mxu0 %v591
        %1137 = vmatprep.subr.mxu0 %v596
        %1138 = vmatpush1.msra.mxu0 %v595
        %1139 = vmatprep.subr.mxu0 %v600
        %1140 = vmatpush1.msra.mxu0 %v599
        %1141 = vmatprep.subr.mxu0 %v604
        %1142 = vmatpush1.msra.mxu0 %v603
        %1143 = vmatprep.subr.mxu0 %v608
        %1144 = vmatpush1.msra.mxu0 %v607
        %1145 = vmatprep.subr.mxu0 %v612
        %1146 = vmatpush1.msra.mxu0 %v611
        %1147 = vmatprep.subr.mxu0 %v616
        %1148 = vmatpush1.msra.mxu0 %v615
        %1149 = vmatprep.subr.mxu0 %v620
        %1150 = vmatpush1.msra.mxu0 %v619
        %1151 = vmatprep.subr.mxu0 %v624
        %1152 = vmatpush1.msra.mxu0 %v623
        %1153 = vmatprep.subr.mxu0 %v628
        %1154 = vmatpush1.msra.mxu0 %v627
        %1155 = vmatprep.subr.mxu0 %v632
        %1156 = vmatpush1.msra.mxu0 %v631
        %1157 = vmatprep.subr.mxu0 %v636
        %1158 = vmatpush1.msra.mxu0 %v635
        %1159 = vmatprep.mubr.f32.mxu0 %v372
        %1160 = vmatmul.mubr.f32.gmra.mrb[0].mxu0 %v371
        %v1161 = vpop.f32.mrb[0].mxu0
        %v1162 = vadd.f32 %v1085, %v1161
        %v1163 = vpop.f32.mrb[0].mxu0
        %v1164 = vadd.f32 %v1087, %v1163
        %1165 = vmatprep.mubr.f32.mxu0 %v378
        %1166 = vmatmul.mubr.f32.gmra.mrb[0].mxu0 %v377
        %v1167 = vpop.f32.mrb[0].mxu0
        %v1168 = vadd.f32 %v1091, %v1167
        %v1169 = vpop.f32.mrb[0].mxu0
        %v1170 = vadd.f32 %v1093, %v1169
        %1171 = vdwg.mxu0
        %1172 = vmatprep.subr.mxu0 %v640
        %1173 = vmatpush1.msra.mxu0 %v639
        %1174 = vmatprep.subr.mxu0 %v644
        %1175 = vmatpush1.msra.mxu0 %v643
        %1176 = vmatprep.subr.mxu0 %v648
        %1177 = vmatpush1.msra.mxu0 %v647
        %1178 = vmatprep.subr.mxu0 %v652
        %1179 = vmatpush1.msra.mxu0 %v651
        %1180 = vmatprep.subr.mxu0 %v656
        %1181 = vmatpush1.msra.mxu0 %v655
        %1182 = vmatprep.subr.mxu0 %v660
        %1183 = vmatpush1.msra.mxu0 %v659
        %1184 = vmatprep.subr.mxu0 %v664
        %1185 = vmatpush1.msra.mxu0 %v663
        %1186 = vmatprep.subr.mxu0 %v668
        %1187 = vmatpush1.msra.mxu0 %v667
        %1188 = vmatprep.subr.mxu0 %v672
        %1189 = vmatpush1.msra.mxu0 %v671
        %1190 = vmatprep.subr.mxu0 %v676
        %1191 = vmatpush1.msra.mxu0 %v675
        %1192 = vmatprep.subr.mxu0 %v680
        %1193 = vmatpush1.msra.mxu0 %v679
        %1194 = vmatprep.subr.mxu0 %v684
        %1195 = vmatpush1.msra.mxu0 %v683
        %1196 = vmatprep.subr.mxu0 %v688
        %1197 = vmatpush1.msra.mxu0 %v687
        %1198 = vmatprep.subr.mxu0 %v692
        %1199 = vmatpush1.msra.mxu0 %v691
        %1200 = vmatprep.subr.mxu0 %v696
        %1201 = vmatpush1.msra.mxu0 %v695
        %1202 = vmatprep.subr.mxu0 %v700
        %1203 = vmatpush1.msra.mxu0 %v699
        %1204 = vmatprep.subr.mxu0 %v704
        %1205 = vmatpush1.msra.mxu0 %v703
        %1206 = vmatprep.subr.mxu0 %v708
        %1207 = vmatpush1.msra.mxu0 %v707
        %1208 = vmatprep.subr.mxu0 %v712
        %1209 = vmatpush1.msra.mxu0 %v711
        %1210 = vmatprep.subr.mxu0 %v716
        %1211 = vmatpush1.msra.mxu0 %v715
        %1212 = vmatprep.subr.mxu0 %v720
        %1213 = vmatpush1.msra.mxu0 %v719
        %1214 = vmatprep.subr.mxu0 %v724
        %1215 = vmatpush1.msra.mxu0 %v723
        %1216 = vmatprep.subr.mxu0 %v728
        %1217 = vmatpush1.msra.mxu0 %v727
        %1218 = vmatprep.subr.mxu0 %v732
        %1219 = vmatpush1.msra.mxu0 %v731
        %1220 = vmatprep.subr.mxu0 %v736
        %1221 = vmatpush1.msra.mxu0 %v735
        %1222 = vmatprep.subr.mxu0 %v740
        %1223 = vmatpush1.msra.mxu0 %v739
        %1224 = vmatprep.subr.mxu0 %v744
        %1225 = vmatpush1.msra.mxu0 %v743
        %1226 = vmatprep.subr.mxu0 %v748
        %1227 = vmatpush1.msra.mxu0 %v747
        %1228 = vmatprep.subr.mxu0 %v752
        %1229 = vmatpush1.msra.mxu0 %v751
        %1230 = vmatprep.subr.mxu0 %v756
        %1231 = vmatpush1.msra.mxu0 %v755
        %1232 = vmatprep.subr.mxu0 %v760
        %1233 = vmatpush1.msra.mxu0 %v759
        %1234 = vmatprep.subr.mxu0 %v764
        %1235 = vmatpush1.msra.mxu0 %v763
        %1236 = vmatprep.mubr.f32.mxu0 %v374
        %1237 = vmatmul.mubr.f32.gmra.mrb[0].mxu0 %v373
        %v1238 = vpop.f32.mrb[0].mxu0
        %v1239 = vadd.f32 %v1162, %v1238
        %v1240 = vpop.f32.mrb[0].mxu0
        %v1241 = vadd.f32 %v1164, %v1240
        %1242 = vmatprep.mubr.f32.mxu0 %v380
        %1243 = vmatmul.mubr.f32.gmra.mrb[0].mxu0 %v379
        %v1244 = vpop.f32.mrb[0].mxu0
        %v1245 = vadd.f32 %v1168, %v1244
        %v1246 = vpop.f32.mrb[0].mxu0
        %v1247 = vadd.f32 %v1170, %v1246
        %1248 = vdwg.mxu0
        %v1249 = vmul.f32 %v1008, 0.70710677
        %v1250 = vmul.f32 %v1010, 0.70710677
        %v1251 = vmul.f32 %v1239, 0.70710677
        %v1252 = vmul.f32 %v1241, 0.70710677
        %v1253 = vmul.f32 %v1014, 0.70710677
        %v1254 = vmul.f32 %v1016, 0.70710677
        %v1255 = vmul.f32 %v1245, 0.70710677
        %v1256 = vmul.f32 %v1247, 0.70710677
        %v1257 = vand.u32 2147483647, %v1249
        %v1258 = vand.u32 2147483647, %v1250
        %v1259 = vand.u32 2147483647, %v1251
        %v1260 = vand.u32 2147483647, %v1252
        %v1261 = vand.u32 2147483647, %v1253
        %v1262 = vand.u32 2147483647, %v1254
        %v1263 = vand.u32 2147483647, %v1255
        %v1264 = vand.u32 2147483647, %v1256
        %v1265 = vmul.f32 %v1257, 0.3275911
        %v1266 = vmul.f32 %v1258, 0.3275911
        %v1267 = vmul.f32 %v1259, 0.3275911
        %v1268 = vmul.f32 %v1260, 0.3275911
        %v1269 = vmul.f32 %v1261, 0.3275911
        %v1270 = vmul.f32 %v1262, 0.3275911
        %v1271 = vmul.f32 %v1263, 0.3275911
        %v1272 = vmul.f32 %v1264, 0.3275911
        %v1273 = vadd.f32 %v1265, 1.0
        %v1274 = vadd.f32 %v1266, 1.0
        %v1275 = vadd.f32 %v1267, 1.0
        %v1276 = vadd.f32 %v1268, 1.0
        %v1277 = vadd.f32 %v1269, 1.0
        %v1278 = vadd.f32 %v1270, 1.0
        %v1279 = vadd.f32 %v1271, 1.0
        %v1280 = vadd.f32 %v1272, 1.0
        %v1281 = vrcp.pop %v1273
        %v1282 = vmul.f32 1.0, %v1281
        %v1283 = vrcp.pop %v1274
        %v1284 = vmul.f32 1.0, %v1283
        %v1285 = vrcp.pop %v1275
        %v1286 = vmul.f32 1.0, %v1285
        %v1287 = vrcp.pop %v1276
        %v1288 = vmul.f32 1.0, %v1287
        %v1289 = vrcp.pop %v1277
        %v1290 = vmul.f32 1.0, %v1289
        %v1291 = vrcp.pop %v1278
        %v1292 = vmul.f32 1.0, %v1291
        %v1293 = vrcp.pop %v1279
        %v1294 = vmul.f32 1.0, %v1293
        %v1295 = vrcp.pop %v1280
        %v1296 = vmul.f32 1.0, %v1295
        %v1297 = vmul.f32 %v1282, 1.0614054
        %v1298 = vmul.f32 %v1284, 1.0614054
        %v1299 = vmul.f32 %v1286, 1.0614054
        %v1300 = vmul.f32 %v1288, 1.0614054
        %v1301 = vmul.f32 %v1290, 1.0614054
        %v1302 = vmul.f32 %v1292, 1.0614054
        %v1303 = vmul.f32 %v1294, 1.0614054
        %v1304 = vmul.f32 %v1296, 1.0614054
        %v1305 = vadd.f32 %v1297, -1.4531521
        %v1306 = vadd.f32 %v1298, -1.4531521
        %v1307 = vadd.f32 %v1299, -1.4531521
        %v1308 = vadd.f32 %v1300, -1.4531521
        %v1309 = vadd.f32 %v1301, -1.4531521
        %v1310 = vadd.f32 %v1302, -1.4531521
        %v1311 = vadd.f32 %v1303, -1.4531521
        %v1312 = vadd.f32 %v1304, -1.4531521
        %v1313 = vmul.f32 %v1282, %v1305
        %v1314 = vmul.f32 %v1284, %v1306
        %v1315 = vmul.f32 %v1286, %v1307
        %v1316 = vmul.f32 %v1288, %v1308
        %v1317 = vmul.f32 %v1290, %v1309
        %v1318 = vmul.f32 %v1292, %v1310
        %v1319 = vmul.f32 %v1294, %v1311
        %v1320 = vmul.f32 %v1296, %v1312
        %v1321 = vadd.f32 %v1313, 1.4214138
        %v1322 = vadd.f32 %v1314, 1.4214138
        %v1323 = vadd.f32 %v1315, 1.4214138
        %v1324 = vadd.f32 %v1316, 1.4214138
        %v1325 = vadd.f32 %v1317, 1.4214138
        %v1326 = vadd.f32 %v1318, 1.4214138
        %v1327 = vadd.f32 %v1319, 1.4214138
        %v1328 = vadd.f32 %v1320, 1.4214138
        %v1329 = vmul.f32 %v1282, %v1321
        %v1330 = vmul.f32 %v1284, %v1322
        %v1331 = vmul.f32 %v1286, %v1323
        %v1332 = vmul.f32 %v1288, %v1324
        %v1333 = vmul.f32 %v1290, %v1325
        %v1334 = vmul.f32 %v1292, %v1326
        %v1335 = vmul.f32 %v1294, %v1327
        %v1336 = vmul.f32 %v1296, %v1328
        %v1337 = vadd.f32 %v1329, -0.28449672
        %v1338 = vadd.f32 %v1330, -0.28449672
        %v1339 = vadd.f32 %v1331, -0.28449672
        %v1340 = vadd.f32 %v1332, -0.28449672
        %v1341 = vadd.f32 %v1333, -0.28449672
        %v1342 = vadd.f32 %v1334, -0.28449672
        %v1343 = vadd.f32 %v1335, -0.28449672
        %v1344 = vadd.f32 %v1336, -0.28449672
        %v1345 = vmul.f32 %v1282, %v1337
        %v1346 = vmul.f32 %v1284, %v1338
        %v1347 = vmul.f32 %v1286, %v1339
        %v1348 = vmul.f32 %v1288, %v1340
        %v1349 = vmul.f32 %v1290, %v1341
        %v1350 = vmul.f32 %v1292, %v1342
        %v1351 = vmul.f32 %v1294, %v1343
        %v1352 = vmul.f32 %v1296, %v1344
        %v1353 = vadd.f32 %v1345, 0.2548296
        %v1354 = vadd.f32 %v1346, 0.2548296
        %v1355 = vadd.f32 %v1347, 0.2548296
        %v1356 = vadd.f32 %v1348, 0.2548296
        %v1357 = vadd.f32 %v1349, 0.2548296
        %v1358 = vadd.f32 %v1350, 0.2548296
        %v1359 = vadd.f32 %v1351, 0.2548296
        %v1360 = vadd.f32 %v1352, 0.2548296
        %v1361 = vmul.f32 %v1282, %v1353
        %v1362 = vmul.f32 %v1284, %v1354
        %v1363 = vmul.f32 %v1286, %v1355
        %v1364 = vmul.f32 %v1288, %v1356
        %v1365 = vmul.f32 %v1290, %v1357
        %v1366 = vmul.f32 %v1292, %v1358
        %v1367 = vmul.f32 %v1294, %v1359
        %v1368 = vmul.f32 %v1296, %v1360
        %v1369 = vsub.f32 0.0, %v1257
        %v1370 = vsub.f32 0.0, %v1258
        %v1371 = vsub.f32 0.0, %v1259
        %v1372 = vsub.f32 0.0, %v1260
        %v1373 = vsub.f32 0.0, %v1261
        %v1374 = vsub.f32 0.0, %v1262
        %v1375 = vsub.f32 0.0, %v1263
        %v1376 = vsub.f32 0.0, %v1264
        %v1377 = vmul.f32 %v1369, %v1257
        %v1378 = vmul.f32 %v1370, %v1258
        %v1379 = vmul.f32 %v1371, %v1259
        %v1380 = vmul.f32 %v1372, %v1260
        %v1381 = vmul.f32 %v1373, %v1261
        %v1382 = vmul.f32 %v1374, %v1262
        %v1383 = vmul.f32 %v1375, %v1263
        %v1384 = vmul.f32 %v1376, %v1264
        %v1385 = vmul.f32 %v1377, 1.442695
        %v1386 = vpow.pop %v1385
        %v1387 = vmul.f32 %v1378, 1.442695
        %v1388 = vpow.pop %v1387
        %v1389 = vmul.f32 %v1379, 1.442695
        %v1390 = vpow.pop %v1389
        %v1391 = vmul.f32 %v1380, 1.442695
        %v1392 = vpow.pop %v1391
        %v1393 = vmul.f32 %v1381, 1.442695
        %v1394 = vpow.pop %v1393
        %v1395 = vmul.f32 %v1382, 1.442695
        %v1396 = vpow.pop %v1395
        %v1397 = vmul.f32 %v1383, 1.442695
        %v1398 = vpow.pop %v1397
        %v1399 = vmul.f32 %v1384, 1.442695
        %v1400 = vpow.pop %v1399
        %v1401 = vmul.f32 %v1361, %v1386
        %v1402 = vmul.f32 %v1362, %v1388
        %v1403 = vmul.f32 %v1363, %v1390
        %v1404 = vmul.f32 %v1364, %v1392
        %v1405 = vmul.f32 %v1365, %v1394
        %v1406 = vmul.f32 %v1366, %v1396
        %v1407 = vmul.f32 %v1367, %v1398
        %v1408 = vmul.f32 %v1368, %v1400
        %v1409 = vsub.f32 1.0, %v1401
        %v1410 = vsub.f32 1.0, %v1402
        %v1411 = vsub.f32 1.0, %v1403
        %v1412 = vsub.f32 1.0, %v1404
        %v1413 = vsub.f32 1.0, %v1405
        %v1414 = vsub.f32 1.0, %v1406
        %v1415 = vsub.f32 1.0, %v1407
        %v1416 = vsub.f32 1.0, %v1408
        %vm1417 = vcmp.ge.f32.partialorder %v1249, 0.0
        %vm1418 = vcmp.ge.f32.partialorder %v1250, 0.0
        %vm1419 = vcmp.ge.f32.partialorder %v1251, 0.0
        %vm1420 = vcmp.ge.f32.partialorder %v1252, 0.0
        %vm1421 = vcmp.ge.f32.partialorder %v1253, 0.0
        %vm1422 = vcmp.ge.f32.partialorder %v1254, 0.0
        %vm1423 = vcmp.ge.f32.partialorder %v1255, 0.0
        %vm1424 = vcmp.ge.f32.partialorder %v1256, 0.0
        %v1425 = vsub.f32 0.0, %v1409
        %v1426 = vsub.f32 0.0, %v1410
        %v1427 = vsub.f32 0.0, %v1411
        %v1428 = vsub.f32 0.0, %v1412
        %v1429 = vsub.f32 0.0, %v1413
        %v1430 = vsub.f32 0.0, %v1414
        %v1431 = vsub.f32 0.0, %v1415
        %v1432 = vsub.f32 0.0, %v1416
        %v1433 = vsel %vm1417, %v1409, %v1425
        %v1434 = vsel %vm1418, %v1410, %v1426
        %v1435 = vsel %vm1419, %v1411, %v1427
        %v1436 = vsel %vm1420, %v1412, %v1428
        %v1437 = vsel %vm1421, %v1413, %v1429
        %v1438 = vsel %vm1422, %v1414, %v1430
        %v1439 = vsel %vm1423, %v1415, %v1431
        %v1440 = vsel %vm1424, %v1416, %v1432
        %v1441 = vmul.f32 %v1008, 0.5
        %v1442 = vmul.f32 %v1010, 0.5
        %v1443 = vmul.f32 %v1239, 0.5
        %v1444 = vmul.f32 %v1241, 0.5
        %v1445 = vmul.f32 %v1014, 0.5
        %v1446 = vmul.f32 %v1016, 0.5
        %v1447 = vmul.f32 %v1245, 0.5
        %v1448 = vmul.f32 %v1247, 0.5
        %v1449 = vadd.f32 %v1433, 1.0
        %v1450 = vadd.f32 %v1434, 1.0
        %v1451 = vadd.f32 %v1435, 1.0
        %v1452 = vadd.f32 %v1436, 1.0
        %v1453 = vadd.f32 %v1437, 1.0
        %v1454 = vadd.f32 %v1438, 1.0
        %v1455 = vadd.f32 %v1439, 1.0
        %v1456 = vadd.f32 %v1440, 1.0
        %v1457 = vmul.f32 %v1441, %v1449
        %v1458 = vmul.f32 %v1442, %v1450
        %v1459 = vmul.f32 %v1443, %v1451
        %v1460 = vmul.f32 %v1444, %v1452
        %v1461 = vmul.f32 %v1445, %v1453
        %v1462 = vmul.f32 %v1446, %v1454
        %v1463 = vmul.f32 %v1447, %v1455
        %v1464 = vmul.f32 %v1448, %v1456
        %v1465 = vld [vmem:[#allocation2] sm:$0xff]
        %v1466 = vld [vmem:[#allocation2 + $0x8] sm:$0xff]
        %v1467 = vld [vmem:[#allocation2 + $0x10] sm:$0xff]
        %v1468 = vld [vmem:[#allocation2 + $0x18] sm:$0xff]
        %v1469 = vld [vmem:[#allocation2 + $0x20] sm:$0xff]
        %v1470 = vld [vmem:[#allocation2 + $0x28] sm:$0xff]
        %v1471 = vld [vmem:[#allocation2 + $0x30] sm:$0xff]
        %v1472 = vld [vmem:[#allocation2 + $0x38] sm:$0xff]
        %v1473 = vld [vmem:[#allocation2 + $0x40] sm:$0xff]
        %v1474 = vld [vmem:[#allocation2 + $0x48] sm:$0xff]
        %v1475 = vld [vmem:[#allocation2 + $0x50] sm:$0xff]
        %v1476 = vld [vmem:[#allocation2 + $0x58] sm:$0xff]
        %v1477 = vld [vmem:[%s316] sm:$0xff]
        %v1478 = vld [vmem:[%s316 + $0x8] sm:$0xff]
        %v1479 = vld [vmem:[%s316 + $0x10] sm:$0xff]
        %v1480 = vld [vmem:[%s316 + $0x18] sm:$0xff]
        %v1481 = vld [vmem:[%s316 + $0x20] sm:$0xff]
        %v1482 = vld [vmem:[%s316 + $0x28] sm:$0xff]
        %v1483 = vld [vmem:[%s316 + $0x30] sm:$0xff]
        %v1484 = vld [vmem:[%s316 + $0x38] sm:$0xff]
        %v1485 = vld [vmem:[%s316 + $0x40] sm:$0xff]
        %v1486 = vld [vmem:[%s316 + $0x48] sm:$0xff]
        %v1487 = vld [vmem:[%s316 + $0x50] sm:$0xff]
        %v1488 = vld [vmem:[%s316 + $0x58] sm:$0xff]
        %v1489 = vld [vmem:[%s316 + $0x60] sm:$0xff]
        %v1490 = vld [vmem:[%s316 + $0x68] sm:$0xff]
        %v1491 = vld [vmem:[%s316 + $0x70] sm:$0xff]
        %v1492 = vld [vmem:[%s316 + $0x78] sm:$0xff]
        %v1493 = vld [vmem:[%s316 + $0x80] sm:$0xff]
        %v1494 = vld [vmem:[%s316 + $0x88] sm:$0xff]
        %v1495 = vld [vmem:[%s316 + $0x90] sm:$0xff]
        %v1496 = vld [vmem:[%s316 + $0x98] sm:$0xff]
        %v1497 = vld [vmem:[%s316 + $0xa0] sm:$0xff]
        %v1498 = vld [vmem:[%s316 + $0xa8] sm:$0xff]
        %v1499 = vld [vmem:[%s316 + $0xb0] sm:$0xff]
        %v1500 = vld [vmem:[%s316 + $0xb8] sm:$0xff]
        %v1501 = vld [vmem:[%s316 + $0xc0] sm:$0xff]
        %v1502 = vld [vmem:[%s316 + $0xc8] sm:$0xff]
        %v1503 = vld [vmem:[%s316 + $0xd0] sm:$0xff]
        %v1504 = vld [vmem:[%s316 + $0xd8] sm:$0xff]
        %v1505 = vld [vmem:[%s316 + $0xe0] sm:$0xff]
        %v1506 = vld [vmem:[%s316 + $0xe8] sm:$0xff]
        %v1507 = vld [vmem:[%s316 + $0xf0] sm:$0xff]
        %v1508 = vld [vmem:[%s316 + $0xf8] sm:$0xff]
        %v1509 = vld [vmem:[%s316 + $0x100] sm:$0xff]
        %v1510 = vld [vmem:[%s316 + $0x108] sm:$0xff]
        %v1511 = vld [vmem:[%s316 + $0x110] sm:$0xff]
        %v1512 = vld [vmem:[%s316 + $0x118] sm:$0xff]
        %v1513 = vld [vmem:[%s316 + $0x120] sm:$0xff]
        %v1514 = vld [vmem:[%s316 + $0x128] sm:$0xff]
        %v1515 = vld [vmem:[%s316 + $0x130] sm:$0xff]
        %v1516 = vld [vmem:[%s316 + $0x138] sm:$0xff]
        %v1517 = vld [vmem:[%s316 + $0x140] sm:$0xff]
        %v1518 = vld [vmem:[%s316 + $0x148] sm:$0xff]
        %v1519 = vld [vmem:[%s316 + $0x150] sm:$0xff]
        %v1520 = vld [vmem:[%s316 + $0x158] sm:$0xff]
        %v1521 = vld [vmem:[%s316 + $0x160] sm:$0xff]
        %v1522 = vld [vmem:[%s316 + $0x168] sm:$0xff]
        %v1523 = vld [vmem:[%s316 + $0x170] sm:$0xff]
        %v1524 = vld [vmem:[%s316 + $0x178] sm:$0xff]
        %v1525 = vld [vmem:[%s316 + $0x180] sm:$0xff]
        %v1526 = vld [vmem:[%s316 + $0x188] sm:$0xff]
        %v1527 = vld [vmem:[%s316 + $0x190] sm:$0xff]
        %v1528 = vld [vmem:[%s316 + $0x198] sm:$0xff]
        %v1529 = vld [vmem:[%s316 + $0x1a0] sm:$0xff]
        %v1530 = vld [vmem:[%s316 + $0x1a8] sm:$0xff]
        %v1531 = vld [vmem:[%s316 + $0x1b0] sm:$0xff]
        %v1532 = vld [vmem:[%s316 + $0x1b8] sm:$0xff]
        %v1533 = vld [vmem:[%s316 + $0x1c0] sm:$0xff]
        %v1534 = vld [vmem:[%s316 + $0x1c8] sm:$0xff]
        %v1535 = vld [vmem:[%s316 + $0x1d0] sm:$0xff]
        %v1536 = vld [vmem:[%s316 + $0x1d8] sm:$0xff]
        %v1537 = vld [vmem:[%s316 + $0x1e0] sm:$0xff]
        %v1538 = vld [vmem:[%s316 + $0x1e8] sm:$0xff]
        %v1539 = vld [vmem:[%s316 + $0x1f0] sm:$0xff]
        %v1540 = vld [vmem:[%s316 + $0x1f8] sm:$0xff]
        %v1541 = vld [vmem:[%s316 + $0x200] sm:$0xff]
        %v1542 = vld [vmem:[%s316 + $0x208] sm:$0xff]
        %v1543 = vld [vmem:[%s316 + $0x210] sm:$0xff]
        %v1544 = vld [vmem:[%s316 + $0x218] sm:$0xff]
        %v1545 = vld [vmem:[%s316 + $0x220] sm:$0xff]
        %v1546 = vld [vmem:[%s316 + $0x228] sm:$0xff]
        %v1547 = vld [vmem:[%s316 + $0x230] sm:$0xff]
        %v1548 = vld [vmem:[%s316 + $0x238] sm:$0xff]
        %v1549 = vld [vmem:[%s316 + $0x240] sm:$0xff]
        %v1550 = vld [vmem:[%s316 + $0x248] sm:$0xff]
        %v1551 = vld [vmem:[%s316 + $0x250] sm:$0xff]
        %v1552 = vld [vmem:[%s316 + $0x258] sm:$0xff]
        %v1553 = vld [vmem:[%s316 + $0x260] sm:$0xff]
        %v1554 = vld [vmem:[%s316 + $0x268] sm:$0xff]
        %v1555 = vld [vmem:[%s316 + $0x270] sm:$0xff]
        %v1556 = vld [vmem:[%s316 + $0x278] sm:$0xff]
        %v1557 = vld [vmem:[%s316 + $0x280] sm:$0xff]
        %v1558 = vld [vmem:[%s316 + $0x288] sm:$0xff]
        %v1559 = vld [vmem:[%s316 + $0x290] sm:$0xff]
        %v1560 = vld [vmem:[%s316 + $0x298] sm:$0xff]
        %v1561 = vld [vmem:[%s316 + $0x2a0] sm:$0xff]
        %v1562 = vld [vmem:[%s316 + $0x2a8] sm:$0xff]
        %v1563 = vld [vmem:[%s316 + $0x2b0] sm:$0xff]
        %v1564 = vld [vmem:[%s316 + $0x2b8] sm:$0xff]
        %v1565 = vld [vmem:[%s316 + $0x2c0] sm:$0xff]
        %v1566 = vld [vmem:[%s316 + $0x2c8] sm:$0xff]
        %v1567 = vld [vmem:[%s316 + $0x2d0] sm:$0xff]
        %v1568 = vld [vmem:[%s316 + $0x2d8] sm:$0xff]
        %v1569 = vld [vmem:[%s316 + $0x2e0] sm:$0xff]
        %v1570 = vld [vmem:[%s316 + $0x2e8] sm:$0xff]
        %v1571 = vld [vmem:[%s316 + $0x2f0] sm:$0xff]
        %v1572 = vld [vmem:[%s316 + $0x2f8] sm:$0xff]
        %v1573 = vld [vmem:[%s316 + $0x300] sm:$0xff]
        %v1574 = vld [vmem:[%s316 + $0x308] sm:$0xff]
        %v1575 = vld [vmem:[%s316 + $0x310] sm:$0xff]
        %v1576 = vld [vmem:[%s316 + $0x318] sm:$0xff]
        %v1577 = vld [vmem:[%s316 + $0x320] sm:$0xff]
        %v1578 = vld [vmem:[%s316 + $0x328] sm:$0xff]
        %v1579 = vld [vmem:[%s316 + $0x330] sm:$0xff]
        %v1580 = vld [vmem:[%s316 + $0x338] sm:$0xff]
        %v1581 = vld [vmem:[%s316 + $0x340] sm:$0xff]
        %v1582 = vld [vmem:[%s316 + $0x348] sm:$0xff]
        %v1583 = vld [vmem:[%s316 + $0x350] sm:$0xff]
        %v1584 = vld [vmem:[%s316 + $0x358] sm:$0xff]
        %v1585 = vld [vmem:[%s316 + $0x360] sm:$0xff]
        %v1586 = vld [vmem:[%s316 + $0x368] sm:$0xff]
        %v1587 = vld [vmem:[%s316 + $0x370] sm:$0xff]
        %v1588 = vld [vmem:[%s316 + $0x378] sm:$0xff]
        %v1589 = vld [vmem:[%s316 + $0x380] sm:$0xff]
        %v1590 = vld [vmem:[%s316 + $0x388] sm:$0xff]
        %v1591 = vld [vmem:[%s316 + $0x390] sm:$0xff]
        %v1592 = vld [vmem:[%s316 + $0x398] sm:$0xff]
        %v1593 = vld [vmem:[%s316 + $0x3a0] sm:$0xff]
        %v1594 = vld [vmem:[%s316 + $0x3a8] sm:$0xff]
        %v1595 = vld [vmem:[%s316 + $0x3b0] sm:$0xff]
        %v1596 = vld [vmem:[%s316 + $0x3b8] sm:$0xff]
        %v1597 = vld [vmem:[%s316 + $0x3c0] sm:$0xff]
        %v1598 = vld [vmem:[%s316 + $0x3c8] sm:$0xff]
        %v1599 = vld [vmem:[%s316 + $0x3d0] sm:$0xff]
        %v1600 = vld [vmem:[%s316 + $0x3d8] sm:$0xff]
        %v1601 = vld [vmem:[%s316 + $0x3e0] sm:$0xff]
        %v1602 = vld [vmem:[%s316 + $0x3e8] sm:$0xff]
        %v1603 = vld [vmem:[%s316 + $0x3f0] sm:$0xff]
        %v1604 = vld [vmem:[%s316 + $0x3f8] sm:$0xff]
        %v1605 = vld [vmem:[%s316 + $0x400] sm:$0xff]
        %v1606 = vld [vmem:[%s316 + $0x408] sm:$0xff]
        %v1607 = vld [vmem:[%s316 + $0x410] sm:$0xff]
        %v1608 = vld [vmem:[%s316 + $0x418] sm:$0xff]
        %v1609 = vld [vmem:[%s316 + $0x420] sm:$0xff]
        %v1610 = vld [vmem:[%s316 + $0x428] sm:$0xff]
        %v1611 = vld [vmem:[%s316 + $0x430] sm:$0xff]
        %v1612 = vld [vmem:[%s316 + $0x438] sm:$0xff]
        %v1613 = vld [vmem:[%s316 + $0x440] sm:$0xff]
        %v1614 = vld [vmem:[%s316 + $0x448] sm:$0xff]
        %v1615 = vld [vmem:[%s316 + $0x450] sm:$0xff]
        %v1616 = vld [vmem:[%s316 + $0x458] sm:$0xff]
        %v1617 = vld [vmem:[%s316 + $0x460] sm:$0xff]
        %v1618 = vld [vmem:[%s316 + $0x468] sm:$0xff]
        %v1619 = vld [vmem:[%s316 + $0x470] sm:$0xff]
        %v1620 = vld [vmem:[%s316 + $0x478] sm:$0xff]
        %v1621 = vld [vmem:[%s316 + $0x480] sm:$0xff]
        %v1622 = vld [vmem:[%s316 + $0x488] sm:$0xff]
        %v1623 = vld [vmem:[%s316 + $0x490] sm:$0xff]
        %v1624 = vld [vmem:[%s316 + $0x498] sm:$0xff]
        %v1625 = vld [vmem:[%s316 + $0x4a0] sm:$0xff]
        %v1626 = vld [vmem:[%s316 + $0x4a8] sm:$0xff]
        %v1627 = vld [vmem:[%s316 + $0x4b0] sm:$0xff]
        %v1628 = vld [vmem:[%s316 + $0x4b8] sm:$0xff]
        %v1629 = vld [vmem:[%s316 + $0x4c0] sm:$0xff]
        %v1630 = vld [vmem:[%s316 + $0x4c8] sm:$0xff]
        %v1631 = vld [vmem:[%s316 + $0x4d0] sm:$0xff]
        %v1632 = vld [vmem:[%s316 + $0x4d8] sm:$0xff]
        %v1633 = vld [vmem:[%s316 + $0x4e0] sm:$0xff]
        %v1634 = vld [vmem:[%s316 + $0x4e8] sm:$0xff]
        %v1635 = vld [vmem:[%s316 + $0x4f0] sm:$0xff]
        %v1636 = vld [vmem:[%s316 + $0x4f8] sm:$0xff]
        %v1637 = vld [vmem:[%s316 + $0x500] sm:$0xff]
        %v1638 = vld [vmem:[%s316 + $0x508] sm:$0xff]
        %v1639 = vld [vmem:[%s316 + $0x510] sm:$0xff]
        %v1640 = vld [vmem:[%s316 + $0x518] sm:$0xff]
        %v1641 = vld [vmem:[%s316 + $0x520] sm:$0xff]
        %v1642 = vld [vmem:[%s316 + $0x528] sm:$0xff]
        %v1643 = vld [vmem:[%s316 + $0x530] sm:$0xff]
        %v1644 = vld [vmem:[%s316 + $0x538] sm:$0xff]
        %v1645 = vld [vmem:[%s316 + $0x540] sm:$0xff]
        %v1646 = vld [vmem:[%s316 + $0x548] sm:$0xff]
        %v1647 = vld [vmem:[%s316 + $0x550] sm:$0xff]
        %v1648 = vld [vmem:[%s316 + $0x558] sm:$0xff]
        %v1649 = vld [vmem:[%s316 + $0x560] sm:$0xff]
        %v1650 = vld [vmem:[%s316 + $0x568] sm:$0xff]
        %v1651 = vld [vmem:[%s316 + $0x570] sm:$0xff]
        %v1652 = vld [vmem:[%s316 + $0x578] sm:$0xff]
        %v1653 = vld [vmem:[%s316 + $0x580] sm:$0xff]
        %v1654 = vld [vmem:[%s316 + $0x588] sm:$0xff]
        %v1655 = vld [vmem:[%s316 + $0x590] sm:$0xff]
        %v1656 = vld [vmem:[%s316 + $0x598] sm:$0xff]
        %v1657 = vld [vmem:[%s316 + $0x5a0] sm:$0xff]
        %v1658 = vld [vmem:[%s316 + $0x5a8] sm:$0xff]
        %v1659 = vld [vmem:[%s316 + $0x5b0] sm:$0xff]
        %v1660 = vld [vmem:[%s316 + $0x5b8] sm:$0xff]
        %v1661 = vld [vmem:[%s316 + $0x5c0] sm:$0xff]
        %v1662 = vld [vmem:[%s316 + $0x5c8] sm:$0xff]
        %v1663 = vld [vmem:[%s316 + $0x5d0] sm:$0xff]
        %v1664 = vld [vmem:[%s316 + $0x5d8] sm:$0xff]
        %v1665 = vld [vmem:[%s316 + $0x5e0] sm:$0xff]
        %v1666 = vld [vmem:[%s316 + $0x5e8] sm:$0xff]
        %v1667 = vld [vmem:[%s316 + $0x5f0] sm:$0xff]
        %v1668 = vld [vmem:[%s316 + $0x5f8] sm:$0xff]
        %v1669 = vld [vmem:[%s316 + $0x600] sm:$0xff]
        %v1670 = vld [vmem:[%s316 + $0x608] sm:$0xff]
        %v1671 = vld [vmem:[%s316 + $0x610] sm:$0xff]
        %v1672 = vld [vmem:[%s316 + $0x618] sm:$0xff]
        %v1673 = vld [vmem:[%s316 + $0x620] sm:$0xff]
        %v1674 = vld [vmem:[%s316 + $0x628] sm:$0xff]
        %v1675 = vld [vmem:[%s316 + $0x630] sm:$0xff]
        %v1676 = vld [vmem:[%s316 + $0x638] sm:$0xff]
        %v1677 = vld [vmem:[%s316 + $0x640] sm:$0xff]
        %v1678 = vld [vmem:[%s316 + $0x648] sm:$0xff]
        %v1679 = vld [vmem:[%s316 + $0x650] sm:$0xff]
        %v1680 = vld [vmem:[%s316 + $0x658] sm:$0xff]
        %v1681 = vld [vmem:[%s316 + $0x660] sm:$0xff]
        %v1682 = vld [vmem:[%s316 + $0x668] sm:$0xff]
        %v1683 = vld [vmem:[%s316 + $0x670] sm:$0xff]
        %v1684 = vld [vmem:[%s316 + $0x678] sm:$0xff]
        %v1685 = vld [vmem:[%s316 + $0x680] sm:$0xff]
        %v1686 = vld [vmem:[%s316 + $0x688] sm:$0xff]
        %v1687 = vld [vmem:[%s316 + $0x690] sm:$0xff]
        %v1688 = vld [vmem:[%s316 + $0x698] sm:$0xff]
        %v1689 = vld [vmem:[%s316 + $0x6a0] sm:$0xff]
        %v1690 = vld [vmem:[%s316 + $0x6a8] sm:$0xff]
        %v1691 = vld [vmem:[%s316 + $0x6b0] sm:$0xff]
        %v1692 = vld [vmem:[%s316 + $0x6b8] sm:$0xff]
        %v1693 = vld [vmem:[%s316 + $0x6c0] sm:$0xff]
        %v1694 = vld [vmem:[%s316 + $0x6c8] sm:$0xff]
        %v1695 = vld [vmem:[%s316 + $0x6d0] sm:$0xff]
        %v1696 = vld [vmem:[%s316 + $0x6d8] sm:$0xff]
        %v1697 = vld [vmem:[%s316 + $0x6e0] sm:$0xff]
        %v1698 = vld [vmem:[%s316 + $0x6e8] sm:$0xff]
        %v1699 = vld [vmem:[%s316 + $0x6f0] sm:$0xff]
        %v1700 = vld [vmem:[%s316 + $0x6f8] sm:$0xff]
        %v1701 = vld [vmem:[%s316 + $0x700] sm:$0xff]
        %v1702 = vld [vmem:[%s316 + $0x708] sm:$0xff]
        %v1703 = vld [vmem:[%s316 + $0x710] sm:$0xff]
        %v1704 = vld [vmem:[%s316 + $0x718] sm:$0xff]
        %v1705 = vld [vmem:[%s316 + $0x720] sm:$0xff]
        %v1706 = vld [vmem:[%s316 + $0x728] sm:$0xff]
        %v1707 = vld [vmem:[%s316 + $0x730] sm:$0xff]
        %v1708 = vld [vmem:[%s316 + $0x738] sm:$0xff]
        %v1709 = vld [vmem:[%s316 + $0x740] sm:$0xff]
        %v1710 = vld [vmem:[%s316 + $0x748] sm:$0xff]
        %v1711 = vld [vmem:[%s316 + $0x750] sm:$0xff]
        %v1712 = vld [vmem:[%s316 + $0x758] sm:$0xff]
        %v1713 = vld [vmem:[%s316 + $0x760] sm:$0xff]
        %v1714 = vld [vmem:[%s316 + $0x768] sm:$0xff]
        %v1715 = vld [vmem:[%s316 + $0x770] sm:$0xff]
        %v1716 = vld [vmem:[%s316 + $0x778] sm:$0xff]
        %v1717 = vld [vmem:[%s316 + $0x780] sm:$0xff]
        %v1718 = vld [vmem:[%s316 + $0x788] sm:$0xff]
        %v1719 = vld [vmem:[%s316 + $0x790] sm:$0xff]
        %v1720 = vld [vmem:[%s316 + $0x798] sm:$0xff]
        %v1721 = vld [vmem:[%s316 + $0x7a0] sm:$0xff]
        %v1722 = vld [vmem:[%s316 + $0x7a8] sm:$0xff]
        %v1723 = vld [vmem:[%s316 + $0x7b0] sm:$0xff]
        %v1724 = vld [vmem:[%s316 + $0x7b8] sm:$0xff]
        %v1725 = vld [vmem:[%s316 + $0x7c0] sm:$0xff]
        %v1726 = vld [vmem:[%s316 + $0x7c8] sm:$0xff]
        %v1727 = vld [vmem:[%s316 + $0x7d0] sm:$0xff]
        %v1728 = vld [vmem:[%s316 + $0x7d8] sm:$0xff]
        %v1729 = vld [vmem:[%s316 + $0x7e0] sm:$0xff]
        %v1730 = vld [vmem:[%s316 + $0x7e8] sm:$0xff]
        %v1731 = vld [vmem:[%s316 + $0x7f0] sm:$0xff]
        %v1732 = vld [vmem:[%s316 + $0x7f8] sm:$0xff]
        %v1733 = vld [vmem:[%s316 + $0x800] sm:$0xff]
        %v1734 = vld [vmem:[%s316 + $0x808] sm:$0xff]
        %v1735 = vld [vmem:[%s316 + $0x810] sm:$0xff]
        %v1736 = vld [vmem:[%s316 + $0x818] sm:$0xff]
        %v1737 = vld [vmem:[%s316 + $0x820] sm:$0xff]
        %v1738 = vld [vmem:[%s316 + $0x828] sm:$0xff]
        %v1739 = vld [vmem:[%s316 + $0x830] sm:$0xff]
        %v1740 = vld [vmem:[%s316 + $0x838] sm:$0xff]
        %v1741 = vld [vmem:[%s316 + $0x840] sm:$0xff]
        %v1742 = vld [vmem:[%s316 + $0x848] sm:$0xff]
        %v1743 = vld [vmem:[%s316 + $0x850] sm:$0xff]
        %v1744 = vld [vmem:[%s316 + $0x858] sm:$0xff]
        %v1745 = vld [vmem:[%s316 + $0x860] sm:$0xff]
        %v1746 = vld [vmem:[%s316 + $0x868] sm:$0xff]
        %v1747 = vld [vmem:[%s316 + $0x870] sm:$0xff]
        %v1748 = vld [vmem:[%s316 + $0x878] sm:$0xff]
        %v1749 = vld [vmem:[%s316 + $0x880] sm:$0xff]
        %v1750 = vld [vmem:[%s316 + $0x888] sm:$0xff]
        %v1751 = vld [vmem:[%s316 + $0x890] sm:$0xff]
        %v1752 = vld [vmem:[%s316 + $0x898] sm:$0xff]
        %v1753 = vld [vmem:[%s316 + $0x8a0] sm:$0xff]
        %v1754 = vld [vmem:[%s316 + $0x8a8] sm:$0xff]
        %v1755 = vld [vmem:[%s316 + $0x8b0] sm:$0xff]
        %v1756 = vld [vmem:[%s316 + $0x8b8] sm:$0xff]
        %v1757 = vld [vmem:[%s316 + $0x8c0] sm:$0xff]
        %v1758 = vld [vmem:[%s316 + $0x8c8] sm:$0xff]
        %v1759 = vld [vmem:[%s316 + $0x8d0] sm:$0xff]
        %v1760 = vld [vmem:[%s316 + $0x8d8] sm:$0xff]
        %v1761 = vld [vmem:[%s316 + $0x8e0] sm:$0xff]
        %v1762 = vld [vmem:[%s316 + $0x8e8] sm:$0xff]
        %v1763 = vld [vmem:[%s316 + $0x8f0] sm:$0xff]
        %v1764 = vld [vmem:[%s316 + $0x8f8] sm:$0xff]
        %v1765 = vld [vmem:[%s316 + $0x900] sm:$0xff]
        %v1766 = vld [vmem:[%s316 + $0x908] sm:$0xff]
        %v1767 = vld [vmem:[%s316 + $0x910] sm:$0xff]
        %v1768 = vld [vmem:[%s316 + $0x918] sm:$0xff]
        %v1769 = vld [vmem:[%s316 + $0x920] sm:$0xff]
        %v1770 = vld [vmem:[%s316 + $0x928] sm:$0xff]
        %v1771 = vld [vmem:[%s316 + $0x930] sm:$0xff]
        %v1772 = vld [vmem:[%s316 + $0x938] sm:$0xff]
        %v1773 = vld [vmem:[%s316 + $0x940] sm:$0xff]
        %v1774 = vld [vmem:[%s316 + $0x948] sm:$0xff]
        %v1775 = vld [vmem:[%s316 + $0x950] sm:$0xff]
        %v1776 = vld [vmem:[%s316 + $0x958] sm:$0xff]
        %v1777 = vld [vmem:[%s316 + $0x960] sm:$0xff]
        %v1778 = vld [vmem:[%s316 + $0x968] sm:$0xff]
        %v1779 = vld [vmem:[%s316 + $0x970] sm:$0xff]
        %v1780 = vld [vmem:[%s316 + $0x978] sm:$0xff]
        %v1781 = vld [vmem:[%s316 + $0x980] sm:$0xff]
        %v1782 = vld [vmem:[%s316 + $0x988] sm:$0xff]
        %v1783 = vld [vmem:[%s316 + $0x990] sm:$0xff]
        %v1784 = vld [vmem:[%s316 + $0x998] sm:$0xff]
        %v1785 = vld [vmem:[%s316 + $0x9a0] sm:$0xff]
        %v1786 = vld [vmem:[%s316 + $0x9a8] sm:$0xff]
        %v1787 = vld [vmem:[%s316 + $0x9b0] sm:$0xff]
        %v1788 = vld [vmem:[%s316 + $0x9b8] sm:$0xff]
        %v1789 = vld [vmem:[%s316 + $0x9c0] sm:$0xff]
        %v1790 = vld [vmem:[%s316 + $0x9c8] sm:$0xff]
        %v1791 = vld [vmem:[%s316 + $0x9d0] sm:$0xff]
        %v1792 = vld [vmem:[%s316 + $0x9d8] sm:$0xff]
        %v1793 = vld [vmem:[%s316 + $0x9e0] sm:$0xff]
        %v1794 = vld [vmem:[%s316 + $0x9e8] sm:$0xff]
        %v1795 = vld [vmem:[%s316 + $0x9f0] sm:$0xff]
        %v1796 = vld [vmem:[%s316 + $0x9f8] sm:$0xff]
        %v1797 = vld [vmem:[%s316 + $0xa00] sm:$0xff]
        %v1798 = vld [vmem:[%s316 + $0xa08] sm:$0xff]
        %v1799 = vld [vmem:[%s316 + $0xa10] sm:$0xff]
        %v1800 = vld [vmem:[%s316 + $0xa18] sm:$0xff]
        %v1801 = vld [vmem:[%s316 + $0xa20] sm:$0xff]
        %v1802 = vld [vmem:[%s316 + $0xa28] sm:$0xff]
        %v1803 = vld [vmem:[%s316 + $0xa30] sm:$0xff]
        %v1804 = vld [vmem:[%s316 + $0xa38] sm:$0xff]
        %v1805 = vld [vmem:[%s316 + $0xa40] sm:$0xff]
        %v1806 = vld [vmem:[%s316 + $0xa48] sm:$0xff]
        %v1807 = vld [vmem:[%s316 + $0xa50] sm:$0xff]
        %v1808 = vld [vmem:[%s316 + $0xa58] sm:$0xff]
        %v1809 = vld [vmem:[%s316 + $0xa60] sm:$0xff]
        %v1810 = vld [vmem:[%s316 + $0xa68] sm:$0xff]
        %v1811 = vld [vmem:[%s316 + $0xa70] sm:$0xff]
        %v1812 = vld [vmem:[%s316 + $0xa78] sm:$0xff]
        %v1813 = vld [vmem:[%s316 + $0xa80] sm:$0xff]
        %v1814 = vld [vmem:[%s316 + $0xa88] sm:$0xff]
        %v1815 = vld [vmem:[%s316 + $0xa90] sm:$0xff]
        %v1816 = vld [vmem:[%s316 + $0xa98] sm:$0xff]
        %v1817 = vld [vmem:[%s316 + $0xaa0] sm:$0xff]
        %v1818 = vld [vmem:[%s316 + $0xaa8] sm:$0xff]
        %v1819 = vld [vmem:[%s316 + $0xab0] sm:$0xff]
        %v1820 = vld [vmem:[%s316 + $0xab8] sm:$0xff]
        %v1821 = vld [vmem:[%s316 + $0xac0] sm:$0xff]
        %v1822 = vld [vmem:[%s316 + $0xac8] sm:$0xff]
        %v1823 = vld [vmem:[%s316 + $0xad0] sm:$0xff]
        %v1824 = vld [vmem:[%s316 + $0xad8] sm:$0xff]
        %v1825 = vld [vmem:[%s316 + $0xae0] sm:$0xff]
        %v1826 = vld [vmem:[%s316 + $0xae8] sm:$0xff]
        %v1827 = vld [vmem:[%s316 + $0xaf0] sm:$0xff]
        %v1828 = vld [vmem:[%s316 + $0xaf8] sm:$0xff]
        %v1829 = vld [vmem:[%s316 + $0xb00] sm:$0xff]
        %v1830 = vld [vmem:[%s316 + $0xb08] sm:$0xff]
        %v1831 = vld [vmem:[%s316 + $0xb10] sm:$0xff]
        %v1832 = vld [vmem:[%s316 + $0xb18] sm:$0xff]
        %v1833 = vld [vmem:[%s316 + $0xb20] sm:$0xff]
        %v1834 = vld [vmem:[%s316 + $0xb28] sm:$0xff]
        %v1835 = vld [vmem:[%s316 + $0xb30] sm:$0xff]
        %v1836 = vld [vmem:[%s316 + $0xb38] sm:$0xff]
        %v1837 = vld [vmem:[%s316 + $0xb40] sm:$0xff]
        %v1838 = vld [vmem:[%s316 + $0xb48] sm:$0xff]
        %v1839 = vld [vmem:[%s316 + $0xb50] sm:$0xff]
        %v1840 = vld [vmem:[%s316 + $0xb58] sm:$0xff]
        %v1841 = vld [vmem:[%s316 + $0xb60] sm:$0xff]
        %v1842 = vld [vmem:[%s316 + $0xb68] sm:$0xff]
        %v1843 = vld [vmem:[%s316 + $0xb70] sm:$0xff]
        %v1844 = vld [vmem:[%s316 + $0xb78] sm:$0xff]
        %v1845 = vld [vmem:[%s316 + $0xb80] sm:$0xff]
        %v1846 = vld [vmem:[%s316 + $0xb88] sm:$0xff]
        %v1847 = vld [vmem:[%s316 + $0xb90] sm:$0xff]
        %v1848 = vld [vmem:[%s316 + $0xb98] sm:$0xff]
        %v1849 = vld [vmem:[%s316 + $0xba0] sm:$0xff]
        %v1850 = vld [vmem:[%s316 + $0xba8] sm:$0xff]
        %v1851 = vld [vmem:[%s316 + $0xbb0] sm:$0xff]
        %v1852 = vld [vmem:[%s316 + $0xbb8] sm:$0xff]
        %v1853 = vld [vmem:[%s316 + $0xbc0] sm:$0xff]
        %v1854 = vld [vmem:[%s316 + $0xbc8] sm:$0xff]
        %v1855 = vld [vmem:[%s316 + $0xbd0] sm:$0xff]
        %v1856 = vld [vmem:[%s316 + $0xbd8] sm:$0xff]
        %v1857 = vld [vmem:[%s316 + $0xbe0] sm:$0xff]
        %v1858 = vld [vmem:[%s316 + $0xbe8] sm:$0xff]
        %v1859 = vld [vmem:[%s316 + $0xbf0] sm:$0xff]
        %v1860 = vld [vmem:[%s316 + $0xbf8] sm:$0xff]
        %1861 = vmatprep.subr.mxu0 %v1478
        %1862 = vmatpush1.msra.mxu0 %v1477
        %1863 = vmatprep.subr.mxu0 %v1484
        %1864 = vmatpush1.msra.mxu0 %v1483
        %1865 = vmatprep.subr.mxu0 %v1490
        %1866 = vmatpush1.msra.mxu0 %v1489
        %1867 = vmatprep.subr.mxu0 %v1496
        %1868 = vmatpush1.msra.mxu0 %v1495
        %1869 = vmatprep.subr.mxu0 %v1502
        %1870 = vmatpush1.msra.mxu0 %v1501
        %1871 = vmatprep.subr.mxu0 %v1508
        %1872 = vmatpush1.msra.mxu0 %v1507
        %1873 = vmatprep.subr.mxu0 %v1514
        %1874 = vmatpush1.msra.mxu0 %v1513
        %1875 = vmatprep.subr.mxu0 %v1520
        %1876 = vmatpush1.msra.mxu0 %v1519
        %1877 = vmatprep.subr.mxu0 %v1526
        %1878 = vmatpush1.msra.mxu0 %v1525
        %1879 = vmatprep.subr.mxu0 %v1532
        %1880 = vmatpush1.msra.mxu0 %v1531
        %1881 = vmatprep.subr.mxu0 %v1538
        %1882 = vmatpush1.msra.mxu0 %v1537
        %1883 = vmatprep.subr.mxu0 %v1544
        %1884 = vmatpush1.msra.mxu0 %v1543
        %1885 = vmatprep.subr.mxu0 %v1550
        %1886 = vmatpush1.msra.mxu0 %v1549
        %1887 = vmatprep.subr.mxu0 %v1556
        %1888 = vmatpush1.msra.mxu0 %v1555
        %1889 = vmatprep.subr.mxu0 %v1562
        %1890 = vmatpush1.msra.mxu0 %v1561
        %1891 = vmatprep.subr.mxu0 %v1568
        %1892 = vmatpush1.msra.mxu0 %v1567
        %1893 = vmatprep.subr.mxu0 %v1574
        %1894 = vmatpush1.msra.mxu0 %v1573
        %1895 = vmatprep.subr.mxu0 %v1580
        %1896 = vmatpush1.msra.mxu0 %v1579
        %1897 = vmatprep.subr.mxu0 %v1586
        %1898 = vmatpush1.msra.mxu0 %v1585
        %1899 = vmatprep.subr.mxu0 %v1592
        %1900 = vmatpush1.msra.mxu0 %v1591
        %1901 = vmatprep.subr.mxu0 %v1598
        %1902 = vmatpush1.msra.mxu0 %v1597
        %1903 = vmatprep.subr.mxu0 %v1604
        %1904 = vmatpush1.msra.mxu0 %v1603
        %1905 = vmatprep.subr.mxu0 %v1610
        %1906 = vmatpush1.msra.mxu0 %v1609
        %1907 = vmatprep.subr.mxu0 %v1616
        %1908 = vmatpush1.msra.mxu0 %v1615
        %1909 = vmatprep.subr.mxu0 %v1622
        %1910 = vmatpush1.msra.mxu0 %v1621
        %1911 = vmatprep.subr.mxu0 %v1628
        %1912 = vmatpush1.msra.mxu0 %v1627
        %1913 = vmatprep.subr.mxu0 %v1634
        %1914 = vmatpush1.msra.mxu0 %v1633
        %1915 = vmatprep.subr.mxu0 %v1640
        %1916 = vmatpush1.msra.mxu0 %v1639
        %1917 = vmatprep.subr.mxu0 %v1646
        %1918 = vmatpush1.msra.mxu0 %v1645
        %1919 = vmatprep.subr.mxu0 %v1652
        %1920 = vmatpush1.msra.mxu0 %v1651
        %1921 = vmatprep.subr.mxu0 %v1658
        %1922 = vmatpush1.msra.mxu0 %v1657
        %1923 = vmatprep.subr.mxu0 %v1664
        %1924 = vmatpush1.msra.mxu0 %v1663
        %1925 = vmatprep.mubr.f32.mxu0 %v1458
        %1926 = vmatmul.mubr.f32.gmra.mrb[0].mxu0 %v1457
        %v1927 = vpop.f32.mrb[0].mxu0
        %v1928 = vadd.f32 0.0, %v1927
        %v1929 = vpop.f32.mrb[0].mxu0
        %v1930 = vadd.f32 0.0, %v1929
        %1931 = vmatprep.mubr.f32.mxu0 %v1462
        %1932 = vmatmul.mubr.f32.gmra.mrb[0].mxu0 %v1461
        %v1933 = vpop.f32.mrb[0].mxu0
        %v1934 = vadd.f32 0.0, %v1933
        %v1935 = vpop.f32.mrb[0].mxu0
        %v1936 = vadd.f32 0.0, %v1935
        %1937 = vdwg.mxu0
        %1938 = vmatprep.subr.mxu0 %v1670
        %1939 = vmatpush1.msra.mxu0 %v1669
        %1940 = vmatprep.subr.mxu0 %v1676
        %1941 = vmatpush1.msra.mxu0 %v1675
        %1942 = vmatprep.subr.mxu0 %v1682
        %1943 = vmatpush1.msra.mxu0 %v1681
        %1944 = vmatprep.subr.mxu0 %v1688
        %1945 = vmatpush1.msra.mxu0 %v1687
        %1946 = vmatprep.subr.mxu0 %v1694
        %1947 = vmatpush1.msra.mxu0 %v1693
        %1948 = vmatprep.subr.mxu0 %v1700
        %1949 = vmatpush1.msra.mxu0 %v1699
        %1950 = vmatprep.subr.mxu0 %v1706
        %1951 = vmatpush1.msra.mxu0 %v1705
        %1952 = vmatprep.subr.mxu0 %v1712
        %1953 = vmatpush1.msra.mxu0 %v1711
        %1954 = vmatprep.subr.mxu0 %v1718
        %1955 = vmatpush1.msra.mxu0 %v1717
        %1956 = vmatprep.subr.mxu0 %v1724
        %1957 = vmatpush1.msra.mxu0 %v1723
        %1958 = vmatprep.subr.mxu0 %v1730
        %1959 = vmatpush1.msra.mxu0 %v1729
        %1960 = vmatprep.subr.mxu0 %v1736
        %1961 = vmatpush1.msra.mxu0 %v1735
        %1962 = vmatprep.subr.mxu0 %v1742
        %1963 = vmatpush1.msra.mxu0 %v1741
        %1964 = vmatprep.subr.mxu0 %v1748
        %1965 = vmatpush1.msra.mxu0 %v1747
        %1966 = vmatprep.subr.mxu0 %v1754
        %1967 = vmatpush1.msra.mxu0 %v1753
        %1968 = vmatprep.subr.mxu0 %v1760
        %1969 = vmatpush1.msra.mxu0 %v1759
        %1970 = vmatprep.subr.mxu0 %v1766
        %1971 = vmatpush1.msra.mxu0 %v1765
        %1972 = vmatprep.subr.mxu0 %v1772
        %1973 = vmatpush1.msra.mxu0 %v1771
        %1974 = vmatprep.subr.mxu0 %v1778
        %1975 = vmatpush1.msra.mxu0 %v1777
        %1976 = vmatprep.subr.mxu0 %v1784
        %1977 = vmatpush1.msra.mxu0 %v1783
        %1978 = vmatprep.subr.mxu0 %v1790
        %1979 = vmatpush1.msra.mxu0 %v1789
        %1980 = vmatprep.subr.mxu0 %v1796
        %1981 = vmatpush1.msra.mxu0 %v1795
        %1982 = vmatprep.subr.mxu0 %v1802
        %1983 = vmatpush1.msra.mxu0 %v1801
        %1984 = vmatprep.subr.mxu0 %v1808
        %1985 = vmatpush1.msra.mxu0 %v1807
        %1986 = vmatprep.subr.mxu0 %v1814
        %1987 = vmatpush1.msra.mxu0 %v1813
        %1988 = vmatprep.subr.mxu0 %v1820
        %1989 = vmatpush1.msra.mxu0 %v1819
        %1990 = vmatprep.subr.mxu0 %v1826
        %1991 = vmatpush1.msra.mxu0 %v1825
        %1992 = vmatprep.subr.mxu0 %v1832
        %1993 = vmatpush1.msra.mxu0 %v1831
        %1994 = vmatprep.subr.mxu0 %v1838
        %1995 = vmatpush1.msra.mxu0 %v1837
        %1996 = vmatprep.subr.mxu0 %v1844
        %1997 = vmatpush1.msra.mxu0 %v1843
        %1998 = vmatprep.subr.mxu0 %v1850
        %1999 = vmatpush1.msra.mxu0 %v1849
        %2000 = vmatprep.subr.mxu0 %v1856
        %2001 = vmatpush1.msra.mxu0 %v1855
        %2002 = vmatprep.mubr.f32.mxu0 %v1460
        %2003 = vmatmul.mubr.f32.gmra.mrb[0].mxu0 %v1459
        %v2004 = vpop.f32.mrb[0].mxu0
        %v2005 = vadd.f32 %v1928, %v2004
        %v2006 = vpop.f32.mrb[0].mxu0
        %v2007 = vadd.f32 %v1930, %v2006
        %2008 = vmatprep.mubr.f32.mxu0 %v1464
        %2009 = vmatmul.mubr.f32.gmra.mrb[0].mxu0 %v1463
        %v2010 = vpop.f32.mrb[0].mxu0
        %v2011 = vadd.f32 %v1934, %v2010
        %v2012 = vpop.f32.mrb[0].mxu0
        %v2013 = vadd.f32 %v1936, %v2012
        %2014 = vdwg.mxu0
        %2015 = vmatprep.subr.mxu0 %v1480
        %2016 = vmatpush1.msra.mxu0 %v1479
        %2017 = vmatprep.subr.mxu0 %v1486
        %2018 = vmatpush1.msra.mxu0 %v1485
        %2019 = vmatprep.subr.mxu0 %v1492
        %2020 = vmatpush1.msra.mxu0 %v1491
        %2021 = vmatprep.subr.mxu0 %v1498
        %2022 = vmatpush1.msra.mxu0 %v1497
        %2023 = vmatprep.subr.mxu0 %v1504
        %2024 = vmatpush1.msra.mxu0 %v1503
        %2025 = vmatprep.subr.mxu0 %v1510
        %2026 = vmatpush1.msra.mxu0 %v1509
        %2027 = vmatprep.subr.mxu0 %v1516
        %2028 = vmatpush1.msra.mxu0 %v1515
        %2029 = vmatprep.subr.mxu0 %v1522
        %2030 = vmatpush1.msra.mxu0 %v1521
        %2031 = vmatprep.subr.mxu0 %v1528
        %2032 = vmatpush1.msra.mxu0 %v1527
        %2033 = vmatprep.subr.mxu0 %v1534
        %2034 = vmatpush1.msra.mxu0 %v1533
        %2035 = vmatprep.subr.mxu0 %v1540
        %2036 = vmatpush1.msra.mxu0 %v1539
        %2037 = vmatprep.subr.mxu0 %v1546
        %2038 = vmatpush1.msra.mxu0 %v1545
        %2039 = vmatprep.subr.mxu0 %v1552
        %2040 = vmatpush1.msra.mxu0 %v1551
        %2041 = vmatprep.subr.mxu0 %v1558
        %2042 = vmatpush1.msra.mxu0 %v1557
        %2043 = vmatprep.subr.mxu0 %v1564
        %2044 = vmatpush1.msra.mxu0 %v1563
        %2045 = vmatprep.subr.mxu0 %v1570
        %2046 = vmatpush1.msra.mxu0 %v1569
        %2047 = vmatprep.subr.mxu0 %v1576
        %2048 = vmatpush1.msra.mxu0 %v1575
        %2049 = vmatprep.subr.mxu0 %v1582
        %2050 = vmatpush1.msra.mxu0 %v1581
        %2051 = vmatprep.subr.mxu0 %v1588
        %2052 = vmatpush1.msra.mxu0 %v1587
        %2053 = vmatprep.subr.mxu0 %v1594
        %2054 = vmatpush1.msra.mxu0 %v1593
        %2055 = vmatprep.subr.mxu0 %v1600
        %2056 = vmatpush1.msra.mxu0 %v1599
        %2057 = vmatprep.subr.mxu0 %v1606
        %2058 = vmatpush1.msra.mxu0 %v1605
        %2059 = vmatprep.subr.mxu0 %v1612
        %2060 = vmatpush1.msra.mxu0 %v1611
        %2061 = vmatprep.subr.mxu0 %v1618
        %2062 = vmatpush1.msra.mxu0 %v1617
        %2063 = vmatprep.subr.mxu0 %v1624
        %2064 = vmatpush1.msra.mxu0 %v1623
        %2065 = vmatprep.subr.mxu0 %v1630
        %2066 = vmatpush1.msra.mxu0 %v1629
        %2067 = vmatprep.subr.mxu0 %v1636
        %2068 = vmatpush1.msra.mxu0 %v1635
        %2069 = vmatprep.subr.mxu0 %v1642
        %2070 = vmatpush1.msra.mxu0 %v1641
        %2071 = vmatprep.subr.mxu0 %v1648
        %2072 = vmatpush1.msra.mxu0 %v1647
        %2073 = vmatprep.subr.mxu0 %v1654
        %2074 = vmatpush1.msra.mxu0 %v1653
        %2075 = vmatprep.subr.mxu0 %v1660
        %2076 = vmatpush1.msra.mxu0 %v1659
        %2077 = vmatprep.subr.mxu0 %v1666
        %2078 = vmatpush1.msra.mxu0 %v1665
        %2079 = vmatprep.mubr.f32.mxu0 %v1458
        %2080 = vmatmul.mubr.f32.gmra.mrb[0].mxu0 %v1457
        %v2081 = vpop.f32.mrb[0].mxu0
        %v2082 = vadd.f32 0.0, %v2081
        %v2083 = vpop.f32.mrb[0].mxu0
        %v2084 = vadd.f32 0.0, %v2083
        %2085 = vmatprep.mubr.f32.mxu0 %v1462
        %2086 = vmatmul.mubr.f32.gmra.mrb[0].mxu0 %v1461
        %v2087 = vpop.f32.mrb[0].mxu0
        %v2088 = vadd.f32 0.0, %v2087
        %v2089 = vpop.f32.mrb[0].mxu0
        %v2090 = vadd.f32 0.0, %v2089
        %2091 = vdwg.mxu0
        %2092 = vmatprep.subr.mxu0 %v1672
        %2093 = vmatpush1.msra.mxu0 %v1671
        %2094 = vmatprep.subr.mxu0 %v1678
        %2095 = vmatpush1.msra.mxu0 %v1677
        %2096 = vmatprep.subr.mxu0 %v1684
        %2097 = vmatpush1.msra.mxu0 %v1683
        %2098 = vmatprep.subr.mxu0 %v1690
        %2099 = vmatpush1.msra.mxu0 %v1689
        %2100 = vmatprep.subr.mxu0 %v1696
        %2101 = vmatpush1.msra.mxu0 %v1695
        %2102 = vmatprep.subr.mxu0 %v1702
        %2103 = vmatpush1.msra.mxu0 %v1701
        %2104 = vmatprep.subr.mxu0 %v1708
        %2105 = vmatpush1.msra.mxu0 %v1707
        %2106 = vmatprep.subr.mxu0 %v1714
        %2107 = vmatpush1.msra.mxu0 %v1713
        %2108 = vmatprep.subr.mxu0 %v1720
        %2109 = vmatpush1.msra.mxu0 %v1719
        %2110 = vmatprep.subr.mxu0 %v1726
        %2111 = vmatpush1.msra.mxu0 %v1725
        %2112 = vmatprep.subr.mxu0 %v1732
        %2113 = vmatpush1.msra.mxu0 %v1731
        %2114 = vmatprep.subr.mxu0 %v1738
        %2115 = vmatpush1.msra.mxu0 %v1737
        %2116 = vmatprep.subr.mxu0 %v1744
        %2117 = vmatpush1.msra.mxu0 %v1743
        %2118 = vmatprep.subr.mxu0 %v1750
        %2119 = vmatpush1.msra.mxu0 %v1749
        %2120 = vmatprep.subr.mxu0 %v1756
        %2121 = vmatpush1.msra.mxu0 %v1755
        %2122 = vmatprep.subr.mxu0 %v1762
        %2123 = vmatpush1.msra.mxu0 %v1761
        %2124 = vmatprep.subr.mxu0 %v1768
        %2125 = vmatpush1.msra.mxu0 %v1767
        %2126 = vmatprep.subr.mxu0 %v1774
        %2127 = vmatpush1.msra.mxu0 %v1773
        %2128 = vmatprep.subr.mxu0 %v1780
        %2129 = vmatpush1.msra.mxu0 %v1779
        %2130 = vmatprep.subr.mxu0 %v1786
        %2131 = vmatpush1.msra.mxu0 %v1785
        %2132 = vmatprep.subr.mxu0 %v1792
        %2133 = vmatpush1.msra.mxu0 %v1791
        %2134 = vmatprep.subr.mxu0 %v1798
        %2135 = vmatpush1.msra.mxu0 %v1797
        %2136 = vmatprep.subr.mxu0 %v1804
        %2137 = vmatpush1.msra.mxu0 %v1803
        %2138 = vmatprep.subr.mxu0 %v1810
        %2139 = vmatpush1.msra.mxu0 %v1809
        %2140 = vmatprep.subr.mxu0 %v1816
        %2141 = vmatpush1.msra.mxu0 %v1815
        %2142 = vmatprep.subr.mxu0 %v1822
        %2143 = vmatpush1.msra.mxu0 %v1821
        %2144 = vmatprep.subr.mxu0 %v1828
        %2145 = vmatpush1.msra.mxu0 %v1827
        %2146 = vmatprep.subr.mxu0 %v1834
        %2147 = vmatpush1.msra.mxu0 %v1833
        %2148 = vmatprep.subr.mxu0 %v1840
        %2149 = vmatpush1.msra.mxu0 %v1839
        %2150 = vmatprep.subr.mxu0 %v1846
        %2151 = vmatpush1.msra.mxu0 %v1845
        %2152 = vmatprep.subr.mxu0 %v1852
        %2153 = vmatpush1.msra.mxu0 %v1851
        %2154 = vmatprep.subr.mxu0 %v1858
        %2155 = vmatpush1.msra.mxu0 %v1857
        %2156 = vmatprep.mubr.f32.mxu0 %v1460
        %2157 = vmatmul.mubr.f32.gmra.mrb[0].mxu0 %v1459
        %v2158 = vpop.f32.mrb[0].mxu0
        %v2159 = vadd.f32 %v2082, %v2158
        %v2160 = vpop.f32.mrb[0].mxu0
        %v2161 = vadd.f32 %v2084, %v2160
        %2162 = vmatprep.mubr.f32.mxu0 %v1464
        %2163 = vmatmul.mubr.f32.gmra.mrb[0].mxu0 %v1463
        %v2164 = vpop.f32.mrb[0].mxu0
        %v2165 = vadd.f32 %v2088, %v2164
        %v2166 = vpop.f32.mrb[0].mxu0
        %v2167 = vadd.f32 %v2090, %v2166
        %2168 = vdwg.mxu0
        %2169 = vmatprep.subr.mxu0 %v1482
        %2170 = vmatpush1.msra.mxu0 %v1481
        %2171 = vmatprep.subr.mxu0 %v1488
        %2172 = vmatpush1.msra.mxu0 %v1487
        %2173 = vmatprep.subr.mxu0 %v1494
        %2174 = vmatpush1.msra.mxu0 %v1493
        %2175 = vmatprep.subr.mxu0 %v1500
        %2176 = vmatpush1.msra.mxu0 %v1499
        %2177 = vmatprep.subr.mxu0 %v1506
        %2178 = vmatpush1.msra.mxu0 %v1505
        %2179 = vmatprep.subr.mxu0 %v1512
        %2180 = vmatpush1.msra.mxu0 %v1511
        %2181 = vmatprep.subr.mxu0 %v1518
        %2182 = vmatpush1.msra.mxu0 %v1517
        %2183 = vmatprep.subr.mxu0 %v1524
        %2184 = vmatpush1.msra.mxu0 %v1523
        %2185 = vmatprep.subr.mxu0 %v1530
        %2186 = vmatpush1.msra.mxu0 %v1529
        %2187 = vmatprep.subr.mxu0 %v1536
        %2188 = vmatpush1.msra.mxu0 %v1535
        %2189 = vmatprep.subr.mxu0 %v1542
        %2190 = vmatpush1.msra.mxu0 %v1541
        %2191 = vmatprep.subr.mxu0 %v1548
        %2192 = vmatpush1.msra.mxu0 %v1547
        %2193 = vmatprep.subr.mxu0 %v1554
        %2194 = vmatpush1.msra.mxu0 %v1553
        %2195 = vmatprep.subr.mxu0 %v1560
        %2196 = vmatpush1.msra.mxu0 %v1559
        %2197 = vmatprep.subr.mxu0 %v1566
        %2198 = vmatpush1.msra.mxu0 %v1565
        %2199 = vmatprep.subr.mxu0 %v1572
        %2200 = vmatpush1.msra.mxu0 %v1571
        %2201 = vmatprep.subr.mxu0 %v1578
        %2202 = vmatpush1.msra.mxu0 %v1577
        %2203 = vmatprep.subr.mxu0 %v1584
        %2204 = vmatpush1.msra.mxu0 %v1583
        %2205 = vmatprep.subr.mxu0 %v1590
        %2206 = vmatpush1.msra.mxu0 %v1589
        %2207 = vmatprep.subr.mxu0 %v1596
        %2208 = vmatpush1.msra.mxu0 %v1595
        %2209 = vmatprep.subr.mxu0 %v1602
        %2210 = vmatpush1.msra.mxu0 %v1601
        %2211 = vmatprep.subr.mxu0 %v1608
        %2212 = vmatpush1.msra.mxu0 %v1607
        %2213 = vmatprep.subr.mxu0 %v1614
        %2214 = vmatpush1.msra.mxu0 %v1613
        %2215 = vmatprep.subr.mxu0 %v1620
        %2216 = vmatpush1.msra.mxu0 %v1619
        %2217 = vmatprep.subr.mxu0 %v1626
        %2218 = vmatpush1.msra.mxu0 %v1625
        %2219 = vmatprep.subr.mxu0 %v1632
        %2220 = vmatpush1.msra.mxu0 %v1631
        %2221 = vmatprep.subr.mxu0 %v1638
        %2222 = vmatpush1.msra.mxu0 %v1637
        %2223 = vmatprep.subr.mxu0 %v1644
        %2224 = vmatpush1.msra.mxu0 %v1643
        %2225 = vmatprep.subr.mxu0 %v1650
        %2226 = vmatpush1.msra.mxu0 %v1649
        %2227 = vmatprep.subr.mxu0 %v1656
        %2228 = vmatpush1.msra.mxu0 %v1655
        %2229 = vmatprep.subr.mxu0 %v1662
        %2230 = vmatpush1.msra.mxu0 %v1661
        %2231 = vmatprep.subr.mxu0 %v1668
        %2232 = vmatpush1.msra.mxu0 %v1667
        %2233 = vmatprep.mubr.f32.mxu0 %v1458
        %2234 = vmatmul.mubr.f32.gmra.mrb[0].mxu0 %v1457
        %v2235 = vpop.f32.mrb[0].mxu0
        %v2236 = vadd.f32 0.0, %v2235
        %v2237 = vpop.f32.mrb[0].mxu0
        %v2238 = vadd.f32 0.0, %v2237
        %2239 = vmatprep.mubr.f32.mxu0 %v1462
        %2240 = vmatmul.mubr.f32.gmra.mrb[0].mxu0 %v1461
        %v2241 = vpop.f32.mrb[0].mxu0
        %v2242 = vadd.f32 0.0, %v2241
        %v2243 = vpop.f32.mrb[0].mxu0
        %v2244 = vadd.f32 0.0, %v2243
        %2245 = vdwg.mxu0
        %2246 = vmatprep.subr.mxu0 %v1674
        %2247 = vmatpush1.msra.mxu0 %v1673
        %2248 = vmatprep.subr.mxu0 %v1680
        %2249 = vmatpush1.msra.mxu0 %v1679
        %2250 = vmatprep.subr.mxu0 %v1686
        %2251 = vmatpush1.msra.mxu0 %v1685
        %2252 = vmatprep.subr.mxu0 %v1692
        %2253 = vmatpush1.msra.mxu0 %v1691
        %2254 = vmatprep.subr.mxu0 %v1698
        %2255 = vmatpush1.msra.mxu0 %v1697
        %2256 = vmatprep.subr.mxu0 %v1704
        %2257 = vmatpush1.msra.mxu0 %v1703
        %2258 = vmatprep.subr.mxu0 %v1710
        %2259 = vmatpush1.msra.mxu0 %v1709
        %2260 = vmatprep.subr.mxu0 %v1716
        %2261 = vmatpush1.msra.mxu0 %v1715
        %2262 = vmatprep.subr.mxu0 %v1722
        %2263 = vmatpush1.msra.mxu0 %v1721
        %2264 = vmatprep.subr.mxu0 %v1728
        %2265 = vmatpush1.msra.mxu0 %v1727
        %2266 = vmatprep.subr.mxu0 %v1734
        %2267 = vmatpush1.msra.mxu0 %v1733
        %2268 = vmatprep.subr.mxu0 %v1740
        %2269 = vmatpush1.msra.mxu0 %v1739
        %2270 = vmatprep.subr.mxu0 %v1746
        %2271 = vmatpush1.msra.mxu0 %v1745
        %2272 = vmatprep.subr.mxu0 %v1752
        %2273 = vmatpush1.msra.mxu0 %v1751
        %2274 = vmatprep.subr.mxu0 %v1758
        %2275 = vmatpush1.msra.mxu0 %v1757
        %2276 = vmatprep.subr.mxu0 %v1764
        %2277 = vmatpush1.msra.mxu0 %v1763
        %2278 = vmatprep.subr.mxu0 %v1770
        %2279 = vmatpush1.msra.mxu0 %v1769
        %2280 = vmatprep.subr.mxu0 %v1776
        %2281 = vmatpush1.msra.mxu0 %v1775
        %2282 = vmatprep.subr.mxu0 %v1782
        %2283 = vmatpush1.msra.mxu0 %v1781
        %2284 = vmatprep.subr.mxu0 %v1788
        %2285 = vmatpush1.msra.mxu0 %v1787
        %2286 = vmatprep.subr.mxu0 %v1794
        %2287 = vmatpush1.msra.mxu0 %v1793
        %2288 = vmatprep.subr.mxu0 %v1800
        %2289 = vmatpush1.msra.mxu0 %v1799
        %2290 = vmatprep.subr.mxu0 %v1806
        %2291 = vmatpush1.msra.mxu0 %v1805
        %2292 = vmatprep.subr.mxu0 %v1812
        %2293 = vmatpush1.msra.mxu0 %v1811
        %2294 = vmatprep.subr.mxu0 %v1818
        %2295 = vmatpush1.msra.mxu0 %v1817
        %2296 = vmatprep.subr.mxu0 %v1824
        %2297 = vmatpush1.msra.mxu0 %v1823
        %2298 = vmatprep.subr.mxu0 %v1830
        %2299 = vmatpush1.msra.mxu0 %v1829
        %2300 = vmatprep.subr.mxu0 %v1836
        %2301 = vmatpush1.msra.mxu0 %v1835
        %2302 = vmatprep.subr.mxu0 %v1842
        %2303 = vmatpush1.msra.mxu0 %v1841
        %2304 = vmatprep.subr.mxu0 %v1848
        %2305 = vmatpush1.msra.mxu0 %v1847
        %2306 = vmatprep.subr.mxu0 %v1854
        %2307 = vmatpush1.msra.mxu0 %v1853
        %2308 = vmatprep.subr.mxu0 %v1860
        %2309 = vmatpush1.msra.mxu0 %v1859
        %2310 = vmatprep.mubr.f32.mxu0 %v1460
        %2311 = vmatmul.mubr.f32.gmra.mrb[0].mxu0 %v1459
        %v2312 = vpop.f32.mrb[0].mxu0
        %v2313 = vadd.f32 %v2236, %v2312
        %v2314 = vpop.f32.mrb[0].mxu0
        %v2315 = vadd.f32 %v2238, %v2314
        %2316 = vmatprep.mubr.f32.mxu0 %v1464
        %2317 = vmatmul.mubr.f32.gmra.mrb[0].mxu0 %v1463
        %v2318 = vpop.f32.mrb[0].mxu0
        %v2319 = vadd.f32 %v2242, %v2318
        %v2320 = vpop.f32.mrb[0].mxu0
        %v2321 = vadd.f32 %v2244, %v2320
        %2322 = vdwg.mxu0
        %v2323 = vadd.f32 %v1465, %v2005
        %v2324 = vadd.f32 %v1466, %v2007
        %v2325 = vadd.f32 %v1467, %v2159
        %v2326 = vadd.f32 %v1468, %v2161
        %v2327 = vadd.f32 %v1469, %v2313
        %v2328 = vadd.f32 %v1470, %v2315
        %v2329 = vadd.f32 %v1471, %v2011
        %v2330 = vadd.f32 %v1472, %v2013
        %v2331 = vadd.f32 %v1473, %v2165
        %v2332 = vadd.f32 %v1474, %v2167
        %v2333 = vadd.f32 %v1475, %v2319
        %v2334 = vadd.f32 %v1476, %v2321
        %2335 = vst [vmem:[#allocation2] sm:$0xff] %v2323
        %2336 = vst [vmem:[#allocation2 + $0x8] sm:$0xff] %v2324
        %2337 = vst [vmem:[#allocation2 + $0x10] sm:$0xff] %v2325
        %2338 = vst [vmem:[#allocation2 + $0x18] sm:$0xff] %v2326
        %2339 = vst [vmem:[#allocation2 + $0x20] sm:$0xff] %v2327
        %2340 = vst [vmem:[#allocation2 + $0x28] sm:$0xff] %v2328
        %2341 = vst [vmem:[#allocation2 + $0x30] sm:$0xff] %v2329
        %2342 = vst [vmem:[#allocation2 + $0x38] sm:$0xff] %v2330
        %2343 = vst [vmem:[#allocation2 + $0x40] sm:$0xff] %v2331
        %2344 = vst [vmem:[#allocation2 + $0x48] sm:$0xff] %v2332
        %2345 = vst [vmem:[#allocation2 + $0x50] sm:$0xff] %v2333
        %2346 = vst [vmem:[#allocation2 + $0x58] sm:$0xff] %v2334
        %p2347 = scmp.eq.s32.totalorder %s29, 5
        // Predicated region
        $region61: #{poswise_ffn.1} parent=39 // pred_check
          %p2348 = pneg %p2347
        $region62: #{poswise_ffn.1} parent=39 // pred_check_branch
          %2350 = sbr.rel (%p2348) target = $region64
        $region63: #{poswise_ffn.1} parent=39 // pred_region
          %v2351 = vld [vmem:[#allocation2] sm:$0xff]
          %v2352 = vld [vmem:[#allocation2 + $0x8] sm:$0xff]
          %v2353 = vld [vmem:[#allocation2 + $0x10] sm:$0xff]
          %v2354 = vld [vmem:[#allocation2 + $0x18] sm:$0xff]
          %v2355 = vld [vmem:[#allocation2 + $0x20] sm:$0xff]
          %v2356 = vld [vmem:[#allocation2 + $0x28] sm:$0xff]
          %v2357 = vld [vmem:[#allocation2 + $0x30] sm:$0xff]
          %v2358 = vld [vmem:[#allocation2 + $0x38] sm:$0xff]
          %v2359 = vld [vmem:[#allocation2 + $0x40] sm:$0xff]
          %v2360 = vld [vmem:[#allocation2 + $0x48] sm:$0xff]
          %v2361 = vld [vmem:[#allocation2 + $0x50] sm:$0xff]
          %v2362 = vld [vmem:[#allocation2 + $0x58] sm:$0xff]
          %v2363 = vld [vmem:[%s4] sm:$0x3f]
          %v2365 = vlaneseq
          %v2366 = vshrl.u32 %v2365, 7
          %v2367 = vsub.s32 0, %v2366
          %v2368 = vrot.slane %v2363, %v2367
          %v2369 = vlaneseq
          %v2370 = vshrl.u32 %v2369, 7
          %v2371 = vsub.s32 1, %v2370
          %v2372 = vrot.slane %v2363, %v2371
          %v2373 = vlaneseq
          %v2374 = vshrl.u32 %v2373, 7
          %v2375 = vsub.s32 2, %v2374
          %v2376 = vrot.slane %v2363, %v2375
          %v2377 = vlaneseq
          %v2378 = vshrl.u32 %v2377, 7
          %v2379 = vsub.s32 3, %v2378
          %v2380 = vrot.slane %v2363, %v2379
          %v2381 = vlaneseq
          %v2382 = vshrl.u32 %v2381, 7
          %v2383 = vsub.s32 4, %v2382
          %v2384 = vrot.slane %v2363, %v2383
          %v2385 = vlaneseq
          %v2386 = vshrl.u32 %v2385, 7
          %v2387 = vsub.s32 5, %v2386
          %v2388 = vrot.slane %v2363, %v2387
          %v2395 = vadd.f32 %v2351, %v2368
          %v2396 = vadd.f32 %v2352, %v2372
          %v2397 = vadd.f32 %v2353, %v2376
          %v2398 = vadd.f32 %v2354, %v2380
          %v2399 = vadd.f32 %v2355, %v2384
          %v2400 = vadd.f32 %v2356, %v2388
          %v2401 = vadd.f32 %v2357, %v2368
          %v2402 = vadd.f32 %v2358, %v2372
          %v2403 = vadd.f32 %v2359, %v2376
          %v2404 = vadd.f32 %v2360, %v2380
          %v2405 = vadd.f32 %v2361, %v2384
          %v2406 = vadd.f32 %v2362, %v2388
          %2407 = vst [vmem:[#allocation11] sm:$0xff] %v2395
          %2408 = vst [vmem:[#allocation11 + $0x8] sm:$0xff] %v2396
          %2409 = vst [vmem:[#allocation11 + $0x10] sm:$0xff] %v2397
          %2410 = vst [vmem:[#allocation11 + $0x18] sm:$0xff] %v2398
          %2411 = vst [vmem:[#allocation11 + $0x20] sm:$0xff] %v2399
          %2412 = vst [vmem:[#allocation11 + $0x28] sm:$0xff] %v2400
          %2413 = vst [vmem:[#allocation11 + $0x30] sm:$0xff] %v2401
          %2414 = vst [vmem:[#allocation11 + $0x38] sm:$0xff] %v2402
          %2415 = vst [vmem:[#allocation11 + $0x40] sm:$0xff] %v2403
          %2416 = vst [vmem:[#allocation11 + $0x48] sm:$0xff] %v2404
          %2417 = vst [vmem:[#allocation11 + $0x50] sm:$0xff] %v2405
          %2418 = vst [vmem:[#allocation11 + $0x58] sm:$0xff] %v2406
        $region64: #{poswise_ffn.1} parent=39 // pred_fallthru
          _
        // Predicated region
        $region65: #{poswise_ffn.1} parent=39 // pred_check
          %p2419 = pneg %p179
        $region66: #{poswise_ffn.1} parent=39 // pred_check_branch
          %2421 = sbr.rel (%p2419) target = $region68
        $region67: #{poswise_ffn.1} parent=39 // pred_region
          %s2422 = smul.u32 2, %s28
          %s2424 = ssub.s32 1536, 1536
          %2425 = vsyncadd [#allocation5], %s2424
          %s2426 = smul.addr %s2422, 6
          %s2427 = smul.addr %s2426, 128
          %s2428 = scalar_lea.hbm %s5, %s2427
          %s2429 = sshll.u32 [#allocation11], 4
          %s2430 = int_to_ptr.vmem [resolvable:$true] %s2429
          %2435 = dma.vmem_to_hbm [thread:$0]  %s2430, 1536, %s2428, [#allocation5], 768, 768, 48
        $region68: #{poswise_ffn.1} parent=39 // pred_fallthru
          _
        // Predicated region
        $region69: #{poswise_ffn.1} parent=39 // pred_check
          %p2436 = pneg %p179
        $region70: #{poswise_ffn.1} parent=39 // pred_check_branch
          %2438 = sbr.rel (%p2436) target = $region72
        $region71: #{poswise_ffn.1} parent=39 // pred_region
          %2439 = dma.done [#allocation5], 1536
        $region72: #{poswise_ffn.1} parent=39 // pred_fallthru
          _
      $region40: #{poswise_ffn.1} parent=5 // pred_fallthru
        _
      %p2440 = scmp.le.s32.totalorder 2, %s19
      // Predicated region
      $region73: #{poswise_ffn.1} parent=5 // pred_check
        %p2441 = pneg %p2440
      $region74: #{poswise_ffn.1} parent=5 // pred_check_branch
        %2443 = sbr.rel (%p2441) target = $region76
      $region75: #{poswise_ffn.1} parent=5 // pred_region
        %s2444 = ssub.s32 %s19, 2
      $region76: #{poswise_ffn.1} parent=5 // pred_fallthru
        _
    $region6: #{poswise_ffn.1} parent=1 // loop_footer
      %s23 = sadd.s32 1, %s19
    $region7: #{poswise_ffn.1} parent=1 // loop_footer_branch
      %18 = sbr.rel target = $region3
    $region8: #{poswise_ffn.1} parent=1 // loop_exit
      _
    %2445 = vsyncpa [#allocation4], 1
    %s2446 = scalar_lea.sflag [#allocation4], 1
    %2447 = vsyncpa %s2446, 1
    %2448 = vsyncpa [#allocation7], 1
    %s2449 = scalar_lea.sflag [#allocation7], 1
    %2450 = vsyncpa %s2449, 1
    %2451 = vsyncpa [#allocation10], 1
    %s2452 = scalar_lea.sflag [#allocation10], 1
    %2453 = vsyncpa %s2452, 1
    %2454 = vsyncpa [#allocation5], 1
    %s2455 = scalar_lea.sflag [#allocation5], 1
    %2456 = vsyncpa %s2455, 1

</llo_original>
